<compile_context>
chip_gen: v7x
topology: tpu7x:2x2x1
jax: 0.10.0
libtpu: 0.0.40
codegen_flags: <defaults>
</compile_context>

<pallas_src>
import functools

import jax
import jax.numpy as jnp
from jax.experimental import pallas as pl
from jax.experimental.pallas import tpu as pltpu


# ----------------------------------------------------------------------------
# Kernel: one batch element, a block of s_tile slices, all channels.
# ----------------------------------------------------------------------------
def _correlation_kernel(x2_ref, x3_ref, w3_ref, w2_ref, bias_ref, mask_ref,
                        o_ref, stack_ref, *, width):
    C = x2_ref.shape[0]
    hw_pad = x2_ref.shape[1]          # padded plane size (multiple of 128)
    L = x3_ref.shape[1]               # s_tile * hw_pad  (lane axis)
    s_tile = L // hw_pad
    taps = [(dy, dx) for dy in (-1, 0, 1) for dx in (-1, 0, 1)]

    x2 = x2_ref[...].astype(jnp.float32)      # (C, hw_pad) shared 2-D features
    x3 = x3_ref[...].astype(jnp.float32)      # (C, L)      s_tile 3-D slices

    # ---- conv_w(feats_2d) once per step (linearity), reusing the scratch ----
    for t, (dy, dx) in enumerate(taps):
        if dy == 0 and dx == 0:
            stack_ref[t * C:(t + 1) * C, :hw_pad] = x2
        else:
            k = dy * width + dx
            stack_ref[t * C:(t + 1) * C, :hw_pad] = (
                pltpu.roll(x2, (-k) % hw_pad, axis=1) * mask_ref[t:t + 1, :])
    # base = [conv_w(x2) + b_w ; b_f]   (bottom half of w2 is zero)
    base = jnp.dot(w2_ref[...], stack_ref[:, :hw_pad],
                   preferred_element_type=jnp.float32) + bias_ref[...]
    if s_tile > 1:
        base = jnp.concatenate([base] * s_tile, axis=1)        # (2C, L)

    # ---- im2col stack of the s_tile slices (scratch bounds live ranges) -----
    for t, (dy, dx) in enumerate(taps):
        if dy == 0 and dx == 0:
            stack_ref[t * C:(t + 1) * C, :] = x3
        else:
            k = dy * width + dx
            m = mask_ref[t:t + 1, :]
            if s_tile > 1:
                m = jnp.concatenate([m] * s_tile, axis=1)       # (1, L)
            stack_ref[t * C:(t + 1) * C, :] = pltpu.roll(x3, (-k) % L, axis=1) * m

    # ---- single stacked MXU matmul + fused epilogue --------------------------
    # rows [:C]  = -conv_w(x3),  rows [C:] = conv_f(x3)
    pre = jnp.dot(w3_ref[...], stack_ref[...],
                  preferred_element_type=jnp.float32) + base    # (2C, L)
    gate = jnp.abs(jnp.tanh(pre[:C, :]))       # conv_w(x2 - x3) + b_w
    feat = pre[C:, :]                          # conv_f(x3) + b_f
    o_ref[...] = (gate * feat).astype(o_ref.dtype)


# ----------------------------------------------------------------------------
# Host-side helpers
# ----------------------------------------------------------------------------
def _round_up(x, m):
    return (x + m - 1) // m * m


def _vmem_capacity_bytes():
    try:
        cap = int(pltpu.get_tpu_info().vmem_capacity_bytes)
        if cap > 0:
            return cap
    except Exception:
        pass
    return 64 << 20          # conservative fallback: v7x per-TensorCore VMEM


def _pick_s_tile(S, C, hw_pad, N, io_itemsize, vmem_cap):
    """Largest divisor of S that fits the per-step VMEM working set and keeps
    at least two grid points (megacore) when possible."""
    budget = int(vmem_cap * 0.55)
    # per slice-plane per step: 2x double-buffered in/out blocks (4*C*io),
    # the (9C, T) f32 im2col scratch (36*C) and f32 matmul/epilogue temps (~36*C).
    per_plane = hw_pad * C * (4 * io_itemsize + 72)
    divisors = [d for d in range(1, S + 1) if S % d == 0]
    fitting = [d for d in divisors if d * per_plane <= budget] or [1]
    multi = [d for d in fitting if N * (S // d) >= 2]
    return max(multi or fitting)


def _tap_masks(H, W, hw_pad):
    """(9, hw_pad) float masks: 0 where a 3x3 tap reads conv zero-padding or a
    padded (beyond H*W) lane."""
    q = jnp.arange(hw_pad, dtype=jnp.int32)
    hh = q // W
    ww = q % W
    in_plane = q < (H * W)
    rows = []
    for dy in (-1, 0, 1):
        for dx in (-1, 0, 1):
            valid = (in_plane & (hh + dy >= 0) & (hh + dy < H)
                     & (ww + dx >= 0) & (ww + dx < W))
            rows.append(valid.astype(jnp.float32))
    return jnp.stack(rows, axis=0)


@jax.jit
def correlation_unit_forward(feats_2d, feats_3d, w_f, b_f, w_w, b_w):
    """feats_2d: (N, C, H, W), feats_3d: (N, C, S, H, W); convs are (C, C, 3, 3)."""
    N, C, H, W = feats_2d.shape
    S = feats_3d.shape[2]
    hw = H * W
    hw_pad = _round_up(hw, 128)                 # lane-dense last dim
    io_bytes = feats_3d.dtype.itemsize
    vmem_cap = _vmem_capacity_bytes()
    s_tile = _pick_s_tile(S, C, hw_pad, N, io_bytes, vmem_cap)
    num_sb = S // s_tile
    T = s_tile * hw_pad

    # Flatten spatial dims; pad each plane up to hw_pad lanes with zeros.
    x2 = feats_2d.reshape(N, C, hw)
    x3 = feats_3d.reshape(N, C, S, hw)
    if hw_pad != hw:
        x2 = jnp.pad(x2, ((0, 0), (0, 0), (0, hw_pad - hw)))
        x3 = jnp.pad(x3, ((0, 0), (0, 0), (0, 0), (0, hw_pad - hw)))
    x3 = x3.reshape(N, C, S * hw_pad)

    # Weight layout: taps stacked on K (columns = tap*Cin + cin), convs on M.
    def k_layout(w):                            # (Cout, Cin, 3, 3) -> (Cout, 9*Cin)
        co, ci, kh, kw = w.shape
        return jnp.transpose(w, (0, 2, 3, 1)).reshape(co, kh * kw * ci).astype(jnp.float32)

    ww_k = k_layout(w_w)
    wf_k = k_layout(w_f)
    w3 = jnp.concatenate([-ww_k, wf_k], axis=0)                    # (2C, 9C)
    w2 = jnp.concatenate([ww_k, jnp.zeros_like(wf_k)], axis=0)     # (2C, 9C)
    bias = jnp.concatenate([b_w.reshape(C, 1), b_f.reshape(C, 1)],
                           axis=0).astype(jnp.float32)             # (2C, 1)
    masks = _tap_masks(H, W, hw_pad)                               # (9, hw_pad)

    kernel = functools.partial(_correlation_kernel, width=W)
    cost = pl.CostEstimate(
        flops=4 * 9 * C * C * N * S * H * W,            # two 3x3 convs
        transcendentals=N * C * S * H * W,              # tanh
        bytes_accessed=(2 * feats_3d.size + feats_2d.size) * io_bytes)

    out = pl.pallas_call(
        kernel,
        out_shape=jax.ShapeDtypeStruct((N, C, S * hw_pad), feats_3d.dtype),
        grid_spec=pltpu.PrefetchScalarGridSpec(
            num_scalar_prefetch=0,
            grid=(N, num_sb),
            in_specs=[
                pl.BlockSpec((None, C, hw_pad), lambda n, sb: (n, 0, 0)),  # feats_2d
                pl.BlockSpec((None, C, T), lambda n, sb: (n, 0, sb)),      # feats_3d block
                pl.BlockSpec((2 * C, 9 * C), lambda n, sb: (0, 0)),        # [-w_w ; w_f]
                pl.BlockSpec((2 * C, 9 * C), lambda n, sb: (0, 0)),        # [ w_w ; 0  ]
                pl.BlockSpec((2 * C, 1), lambda n, sb: (0, 0)),            # [ b_w ; b_f]
                pl.BlockSpec((9, hw_pad), lambda n, sb: (0, 0)),           # tap masks
            ],
            out_specs=pl.BlockSpec((None, C, T), lambda n, sb: (n, 0, sb)),
            scratch_shapes=[pltpu.VMEM((9 * C, T), jnp.float32)],          # im2col stack
        ),
        compiler_params=pltpu.CompilerParams(
            dimension_semantics=("parallel", "parallel"),
            vmem_limit_bytes=int(vmem_cap * 0.85)),
        cost_estimate=cost,
    )(x2, x3, w3, w2, bias, masks)

    out = out.reshape(N, C, S, hw_pad)[..., :hw]
    return out.reshape(N, C, S, H, W)


# ----------------------------------------------------------------------------
# Pure-JAX reference (explicit 3x3 conv, PyTorch padding=1 semantics)
# ----------------------------------------------------------------------------
def _conv3x3_ref(x, w, b):
    N, Cin, H, W = x.shape
    xp = jnp.pad(x, ((0, 0), (0, 0), (1, 1), (1, 1)))
    out = jnp.zeros((N, w.shape[0], H, W), jnp.float32)
    for ky in range(3):
        for kx in range(3):
            patch = xp[:, :, ky:ky + H, kx:kx + W].astype(jnp.float32)
            out = out + jnp.einsum('oi,nihw->nohw',
                                   w[:, :, ky, kx].astype(jnp.float32), patch,
                                   precision=jax.lax.Precision.HIGHEST)
    return out + b[None, :, None, None]


def _reference(feats_2d, feats_3d, w_f, b_f, w_w, b_w):
    S = feats_3d.shape[2]
    outs = []
    for s in range(S):
        xj = feats_3d[:, :, s]
        diff = feats_2d - xj
        g = jnp.abs(jnp.tanh(_conv3x3_ref(diff, w_w, b_w)))
        f = _conv3x3_ref(xj, w_f, b_f)
        outs.append(g * f)
    return jnp.stack(outs, axis=2).astype(feats_3d.dtype)


if __name__ == "__main__":
    key = jax.random.PRNGKey(0)
    keys = jax.random.split(key, 12)

    def run_case(N, C, S, H, W, ks):
        k1, k2, k3, k4, k5, k6 = ks
        feats_2d = jax.random.normal(k1, (N, C, H, W), jnp.float32)
        feats_3d = jax.random.normal(k2, (N, C, S, H, W), jnp.float32)
        fan_in = C * 9
        w_f = jax.random.normal(k3, (C, C, 3, 3), jnp.float32) / jnp.sqrt(fan_in)
        b_f = jax.random.normal(k4, (C,), jnp.float32) * 0.1
        w_w = jax.random.normal(k5, (C, C, 3, 3), jnp.float32) / jnp.sqrt(fan_in)
        b_w = jax.random.normal(k6, (C,), jnp.float32) * 0.1

        out = correlation_unit_forward(feats_2d, feats_3d, w_f, b_f, w_w, b_w)
        out = jax.block_until_ready(out)
        ref = _reference(feats_2d, feats_3d, w_f, b_f, w_w, b_w)
        assert out.shape == (N, C, S, H, W), out.shape
        err = float(jnp.max(jnp.abs(out - ref)))
        assert err < 1e-3, err

    run_case(2, 4, 3, 16, 16, keys[:6])    # lane-aligned H*W
    run_case(1, 4, 2, 10, 10, keys[6:])    # H*W padded to 128 lanes, s_tile=1 path
    print("KERNEL_OK")
</pallas_src>

<mosaic_0001>
module attributes {stable_mosaic.version = 11 : i64} {
  func.func @_correlation_kernel(%arg0: i32, %arg1: i32, %arg2: memref<1x4x256xf32, #tpu.memory_space<vmem>>, %arg3: memref<1x4x768xf32, #tpu.memory_space<vmem>>, %arg4: memref<8x36xf32, #tpu.memory_space<vmem>>, %arg5: memref<8x36xf32, #tpu.memory_space<vmem>>, %arg6: memref<8x1xf32, #tpu.memory_space<vmem>>, %arg7: memref<9x256xf32, #tpu.memory_space<vmem>>, %arg8: memref<1x4x768xf32, #tpu.memory_space<vmem>>, %arg9: memref<36x768xf32, #tpu.memory_space<vmem>>) attributes {dimension_semantics = [#tpu.dimension_semantics<parallel>, #tpu.dimension_semantics<parallel>], iteration_bounds = array<i64: 2, 1>, scalar_prefetch = 0 : i64, scratch_operands = 1 : i64, tpu.core_type = #tpu.core_type<tc>, window_params = [{transform_indices = @transform_0, window_bounds = array<i64: 1, 4, 256>}, {transform_indices = @transform_1, window_bounds = array<i64: 1, 4, 768>}, {pipeline_mode = #tpu.pipeline_mode<synchronous>, transform_indices = @transform_2, window_bounds = array<i64: 8, 36>}, {pipeline_mode = #tpu.pipeline_mode<synchronous>, transform_indices = @transform_3, window_bounds = array<i64: 8, 36>}, {pipeline_mode = #tpu.pipeline_mode<synchronous>, transform_indices = @transform_4, window_bounds = array<i64: 8, 1>}, {pipeline_mode = #tpu.pipeline_mode<synchronous>, transform_indices = @transform_5, window_bounds = array<i64: 9, 256>}, {transform_indices = @transform_6, window_bounds = array<i64: 1, 4, 768>}]} {
    %c0 = arith.constant 0 : index
    %c0_0 = arith.constant 0 : index
    %c0_1 = arith.constant 0 : index
    %0 = vector.load %arg2[%c0, %c0_0, %c0_1] : memref<1x4x256xf32, #tpu.memory_space<vmem>>, vector<1x4x256xf32>
    %1 = vector.shape_cast %0 : vector<1x4x256xf32> to vector<4x256xf32>
    %c0_2 = arith.constant 0 : index
    %c0_3 = arith.constant 0 : index
    %c0_4 = arith.constant 0 : index
    %2 = vector.load %arg3[%c0_2, %c0_3, %c0_4] : memref<1x4x768xf32, #tpu.memory_space<vmem>>, vector<1x4x768xf32>
    %3 = vector.shape_cast %2 : vector<1x4x768xf32> to vector<4x768xf32>
    %c17_i32 = arith.constant 17 : i32
    %4 = tpu.dynamic_rotate %1 by %c17_i32 dim 1 : vector<4x256xf32>, i32 -> vector<4x256xf32>
    %c0_5 = arith.constant 0 : index
    %c0_6 = arith.constant 0 : index
    %5 = vector.load %arg7[%c0_5, %c0_6] : memref<9x256xf32, #tpu.memory_space<vmem>>, vector<1x256xf32>
    %6 = vector.broadcast %5 : vector<1x256xf32> to vector<4x256xf32>
    %7 = arith.mulf %4, %6 : vector<4x256xf32>
    %c0_7 = arith.constant 0 : index
    %c0_8 = arith.constant 0 : index
    %8 = vector.load %arg9[%c0_7, %c0_8] : memref<36x768xf32, #tpu.memory_space<vmem>>, vector<4x256xf32>
    tpu.vector_store %arg9[%c0_7, %c0_8], %7 {strides = array<i32>} : memref<36x768xf32, #tpu.memory_space<vmem>>, vector<4x256xf32>,
    %c16_i32 = arith.constant 16 : i32
    %9 = tpu.dynamic_rotate %1 by %c16_i32 dim 1 : vector<4x256xf32>, i32 -> vector<4x256xf32>
    %c1 = arith.constant 1 : index
    %c0_9 = arith.constant 0 : index
    %10 = vector.load %arg7[%c1, %c0_9] : memref<9x256xf32, #tpu.memory_space<vmem>>, vector<1x256xf32>
    %11 = vector.broadcast %10 : vector<1x256xf32> to vector<4x256xf32>
    %12 = arith.mulf %9, %11 : vector<4x256xf32>
    %c4 = arith.constant 4 : index
    %c0_10 = arith.constant 0 : index
    %13 = vector.load %arg9[%c4, %c0_10] : memref<36x768xf32, #tpu.memory_space<vmem>>, vector<4x256xf32>
    tpu.vector_store %arg9[%c4, %c0_10], %12 {strides = array<i32>} : memref<36x768xf32, #tpu.memory_space<vmem>>, vector<4x256xf32>,
    %c15_i32 = arith.constant 15 : i32
    %14 = tpu.dynamic_rotate %1 by %c15_i32 dim 1 : vector<4x256xf32>, i32 -> vector<4x256xf32>
    %c2 = arith.constant 2 : index
    %c0_11 = arith.constant 0 : index
    %15 = vector.load %arg7[%c2, %c0_11] : memref<9x256xf32, #tpu.memory_space<vmem>>, vector<1x256xf32>
    %16 = vector.broadcast %15 : vector<1x256xf32> to vector<4x256xf32>
    %17 = arith.mulf %14, %16 : vector<4x256xf32>
    %c8 = arith.constant 8 : index
    %c0_12 = arith.constant 0 : index
    %18 = vector.load %arg9[%c8, %c0_12] : memref<36x768xf32, #tpu.memory_space<vmem>>, vector<4x256xf32>
    tpu.vector_store %arg9[%c8, %c0_12], %17 {strides = array<i32>} : memref<36x768xf32, #tpu.memory_space<vmem>>, vector<4x256xf32>,
    %c1_i32 = arith.constant 1 : i32
    %19 = tpu.dynamic_rotate %1 by %c1_i32 dim 1 : vector<4x256xf32>, i32 -> vector<4x256xf32>
    %c3 = arith.constant 3 : index
    %c0_13 = arith.constant 0 : index
    %20 = vector.load %arg7[%c3, %c0_13] : memref<9x256xf32, #tpu.memory_space<vmem>>, vector<1x256xf32>
    %21 = vector.broadcast %20 : vector<1x256xf32> to vector<4x256xf32>
    %22 = arith.mulf %19, %21 : vector<4x256xf32>
    %c12 = arith.constant 12 : index
    %c0_14 = arith.constant 0 : index
    %23 = vector.load %arg9[%c12, %c0_14] : memref<36x768xf32, #tpu.memory_space<vmem>>, vector<4x256xf32>
    tpu.vector_store %arg9[%c12, %c0_14], %22 {strides = array<i32>} : memref<36x768xf32, #tpu.memory_space<vmem>>, vector<4x256xf32>,
    %c16 = arith.constant 16 : index
    %c0_15 = arith.constant 0 : index
    %24 = vector.load %arg9[%c16, %c0_15] : memref<36x768xf32, #tpu.memory_space<vmem>>, vector<4x256xf32>
    tpu.vector_store %arg9[%c16, %c0_15], %1 {strides = array<i32>} : memref<36x768xf32, #tpu.memory_space<vmem>>, vector<4x256xf32>,
    %c255_i32 = arith.constant 255 : i32
    %25 = tpu.dynamic_rotate %1 by %c255_i32 dim 1 : vector<4x256xf32>, i32 -> vector<4x256xf32>
    %c5 = arith.constant 5 : index
    %c0_16 = arith.constant 0 : index
    %26 = vector.load %arg7[%c5, %c0_16] : memref<9x256xf32, #tpu.memory_space<vmem>>, vector<1x256xf32>
    %27 = vector.broadcast %26 : vector<1x256xf32> to vector<4x256xf32>
    %28 = arith.mulf %25, %27 : vector<4x256xf32>
    %c20 = arith.constant 20 : index
    %c0_17 = arith.constant 0 : index
    %29 = vector.load %arg9[%c20, %c0_17] : memref<36x768xf32, #tpu.memory_space<vmem>>, vector<4x256xf32>
    tpu.vector_store %arg9[%c20, %c0_17], %28 {strides = array<i32>} : memref<36x768xf32, #tpu.memory_space<vmem>>, vector<4x256xf32>,
    %c241_i32 = arith.constant 241 : i32
    %30 = tpu.dynamic_rotate %1 by %c241_i32 dim 1 : vector<4x256xf32>, i32 -> vector<4x256xf32>
    %c6 = arith.constant 6 : index
    %c0_18 = arith.constant 0 : index
    %31 = vector.load %arg7[%c6, %c0_18] : memref<9x256xf32, #tpu.memory_space<vmem>>, vector<1x256xf32>
    %32 = vector.broadcast %31 : vector<1x256xf32> to vector<4x256xf32>
    %33 = arith.mulf %30, %32 : vector<4x256xf32>
    %c24 = arith.constant 24 : index
    %c0_19 = arith.constant 0 : index
    %34 = vector.load %arg9[%c24, %c0_19] : memref<36x768xf32, #tpu.memory_space<vmem>>, vector<4x256xf32>
    tpu.vector_store %arg9[%c24, %c0_19], %33 {strides = array<i32>} : memref<36x768xf32, #tpu.memory_space<vmem>>, vector<4x256xf32>,
    %c240_i32 = arith.constant 240 : i32
    %35 = tpu.dynamic_rotate %1 by %c240_i32 dim 1 : vector<4x256xf32>, i32 -> vector<4x256xf32>
    %c7 = arith.constant 7 : index
    %c0_20 = arith.constant 0 : index
    %36 = vector.load %arg7[%c7, %c0_20] : memref<9x256xf32, #tpu.memory_space<vmem>>, vector<1x256xf32>
    %37 = vector.broadcast %36 : vector<1x256xf32> to vector<4x256xf32>
    %38 = arith.mulf %35, %37 : vector<4x256xf32>
    %c28 = arith.constant 28 : index
    %c0_21 = arith.constant 0 : index
    %39 = vector.load %arg9[%c28, %c0_21] : memref<36x768xf32, #tpu.memory_space<vmem>>, vector<4x256xf32>
    tpu.vector_store %arg9[%c28, %c0_21], %38 {strides = array<i32>} : memref<36x768xf32, #tpu.memory_space<vmem>>, vector<4x256xf32>,
    %c239_i32 = arith.constant 239 : i32
    %40 = tpu.dynamic_rotate %1 by %c239_i32 dim 1 : vector<4x256xf32>, i32 -> vector<4x256xf32>
    %c8_22 = arith.constant 8 : index
    %c0_23 = arith.constant 0 : index
    %41 = vector.load %arg7[%c8_22, %c0_23] : memref<9x256xf32, #tpu.memory_space<vmem>>, vector<1x256xf32>
    %42 = vector.broadcast %41 : vector<1x256xf32> to vector<4x256xf32>
    %43 = arith.mulf %40, %42 : vector<4x256xf32>
    %c32 = arith.constant 32 : index
    %c0_24 = arith.constant 0 : index
    %44 = vector.load %arg9[%c32, %c0_24] : memref<36x768xf32, #tpu.memory_space<vmem>>, vector<4x256xf32>
    tpu.vector_store %arg9[%c32, %c0_24], %43 {strides = array<i32>} : memref<36x768xf32, #tpu.memory_space<vmem>>, vector<4x256xf32>,
    %c0_25 = arith.constant 0 : index
    %c0_26 = arith.constant 0 : index
    %45 = vector.load %arg5[%c0_25, %c0_26] : memref<8x36xf32, #tpu.memory_space<vmem>>, vector<8x36xf32>
    %c0_27 = arith.constant 0 : index
    %c0_28 = arith.constant 0 : index
    %46 = vector.load %arg9[%c0_27, %c0_28] : memref<36x768xf32, #tpu.memory_space<vmem>>, vector<36x256xf32>
    %cst = arith.constant dense<0.000000e+00> : vector<8x256xf32>
    %47 = tpu.matmul %45, %46, %cst {dimension_numbers = #tpu.dot_dimension_numbers<[1], [0], [0], [1], [0, 0, 1, 1], [], []>} : vector<8x36xf32>, vector<36x256xf32>, vector<8x256xf32> -> vector<8x256xf32>
    %c0_29 = arith.constant 0 : index
    %c0_30 = arith.constant 0 : index
    %48 = vector.load %arg6[%c0_29, %c0_30] : memref<8x1xf32, #tpu.memory_space<vmem>>, vector<8x1xf32>
    %49 = vector.broadcast %48 : vector<8x1xf32> to vector<8x256xf32>
    %50 = arith.addf %47, %49 : vector<8x256xf32>
    %51 = tpu.concatenate %50, %50, %50 in 1 : vector<8x256xf32>, vector<8x256xf32>, vector<8x256xf32> -> vector<8x768xf32>
    %c0_31 = arith.constant 0 : index
    %c0_32 = arith.constant 0 : index
    %52 = vector.load %arg7[%c0_31, %c0_32] : memref<9x256xf32, #tpu.memory_space<vmem>>, vector<1x256xf32>
    %53 = tpu.concatenate %52, %52, %52 in 1 : vector<1x256xf32>, vector<1x256xf32>, vector<1x256xf32> -> vector<1x768xf32>
    %c17_i32_33 = arith.constant 17 : i32
    %54 = tpu.dynamic_rotate %3 by %c17_i32_33 dim 1 : vector<4x768xf32>, i32 -> vector<4x768xf32>
    %55 = vector.broadcast %53 : vector<1x768xf32> to vector<4x768xf32>
    %56 = arith.mulf %54, %55 : vector<4x768xf32>
    %c0_34 = arith.constant 0 : index
    %c0_35 = arith.constant 0 : index
    %57 = vector.load %arg9[%c0_34, %c0_35] : memref<36x768xf32, #tpu.memory_space<vmem>>, vector<4x768xf32>
    tpu.vector_store %arg9[%c0_34, %c0_35], %56 {strides = array<i32>} : memref<36x768xf32, #tpu.memory_space<vmem>>, vector<4x768xf32>,
    %c1_36 = arith.constant 1 : index
    %c0_37 = arith.constant 0 : index
    %58 = vector.load %arg7[%c1_36, %c0_37] : memref<9x256xf32, #tpu.memory_space<vmem>>, vector<1x256xf32>
    %59 = tpu.concatenate %58, %58, %58 in 1 : vector<1x256xf32>, vector<1x256xf32>, vector<1x256xf32> -> vector<1x768xf32>
    %c16_i32_38 = arith.constant 16 : i32
    %60 = tpu.dynamic_rotate %3 by %c16_i32_38 dim 1 : vector<4x768xf32>, i32 -> vector<4x768xf32>
    %61 = vector.broadcast %59 : vector<1x768xf32> to vector<4x768xf32>
    %62 = arith.mulf %60, %61 : vector<4x768xf32>
    %c4_39 = arith.constant 4 : index
    %c0_40 = arith.constant 0 : index
    %63 = vector.load %arg9[%c4_39, %c0_40] : memref<36x768xf32, #tpu.memory_space<vmem>>, vector<4x768xf32>
    tpu.vector_store %arg9[%c4_39, %c0_40], %62 {strides = array<i32>} : memref<36x768xf32, #tpu.memory_space<vmem>>, vector<4x768xf32>,
    %c2_41 = arith.constant 2 : index
    %c0_42 = arith.constant 0 : index
    %64 = vector.load %arg7[%c2_41, %c0_42] : memref<9x256xf32, #tpu.memory_space<vmem>>, vector<1x256xf32>
    %65 = tpu.concatenate %64, %64, %64 in 1 : vector<1x256xf32>, vector<1x256xf32>, vector<1x256xf32> -> vector<1x768xf32>
    %c15_i32_43 = arith.constant 15 : i32
    %66 = tpu.dynamic_rotate %3 by %c15_i32_43 dim 1 : vector<4x768xf32>, i32 -> vector<4x768xf32>
    %67 = vector.broadcast %65 : vector<1x768xf32> to vector<4x768xf32>
    %68 = arith.mulf %66, %67 : vector<4x768xf32>
    %c8_44 = arith.constant 8 : index
    %c0_45 = arith.constant 0 : index
    %69 = vector.load %arg9[%c8_44, %c0_45] : memref<36x768xf32, #tpu.memory_space<vmem>>, vector<4x768xf32>
    tpu.vector_store %arg9[%c8_44, %c0_45], %68 {strides = array<i32>} : memref<36x768xf32, #tpu.memory_space<vmem>>, vector<4x768xf32>,
    %c3_46 = arith.constant 3 : index
    %c0_47 = arith.constant 0 : index
    %70 = vector.load %arg7[%c3_46, %c0_47] : memref<9x256xf32, #tpu.memory_space<vmem>>, vector<1x256xf32>
    %71 = tpu.concatenate %70, %70, %70 in 1 : vector<1x256xf32>, vector<1x256xf32>, vector<1x256xf32> -> vector<1x768xf32>
    %c1_i32_48 = arith.constant 1 : i32
    %72 = tpu.dynamic_rotate %3 by %c1_i32_48 dim 1 : vector<4x768xf32>, i32 -> vector<4x768xf32>
    %73 = vector.broadcast %71 : vector<1x768xf32> to vector<4x768xf32>
    %74 = arith.mulf %72, %73 : vector<4x768xf32>
    %c12_49 = arith.constant 12 : index
    %c0_50 = arith.constant 0 : index
    %75 = vector.load %arg9[%c12_49, %c0_50] : memref<36x768xf32, #tpu.memory_space<vmem>>, vector<4x768xf32>
    tpu.vector_store %arg9[%c12_49, %c0_50], %74 {strides = array<i32>} : memref<36x768xf32, #tpu.memory_space<vmem>>, vector<4x768xf32>,
    %c16_51 = arith.constant 16 : index
    %c0_52 = arith.constant 0 : index
    %76 = vector.load %arg9[%c16_51, %c0_52] : memref<36x768xf32, #tpu.memory_space<vmem>>, vector<4x768xf32>
    tpu.vector_store %arg9[%c16_51, %c0_52], %3 {strides = array<i32>} : memref<36x768xf32, #tpu.memory_space<vmem>>, vector<4x768xf32>,
    %c5_53 = arith.constant 5 : index
    %c0_54 = arith.constant 0 : index
    %77 = vector.load %arg7[%c5_53, %c0_54] : memref<9x256xf32, #tpu.memory_space<vmem>>, vector<1x256xf32>
    %78 = tpu.concatenate %77, %77, %77 in 1 : vector<1x256xf32>, vector<1x256xf32>, vector<1x256xf32> -> vector<1x768xf32>
    %c767_i32 = arith.constant 767 : i32
    %79 = tpu.dynamic_rotate %3 by %c767_i32 dim 1 : vector<4x768xf32>, i32 -> vector<4x768xf32>
    %80 = vector.broadcast %78 : vector<1x768xf32> to vector<4x768xf32>
    %81 = arith.mulf %79, %80 : vector<4x768xf32>
    %c20_55 = arith.constant 20 : index
    %c0_56 = arith.constant 0 : index
    %82 = vector.load %arg9[%c20_55, %c0_56] : memref<36x768xf32, #tpu.memory_space<vmem>>, vector<4x768xf32>
    tpu.vector_store %arg9[%c20_55, %c0_56], %81 {strides = array<i32>} : memref<36x768xf32, #tpu.memory_space<vmem>>, vector<4x768xf32>,
    %c6_57 = arith.constant 6 : index
    %c0_58 = arith.constant 0 : index
    %83 = vector.load %arg7[%c6_57, %c0_58] : memref<9x256xf32, #tpu.memory_space<vmem>>, vector<1x256xf32>
    %84 = tpu.concatenate %83, %83, %83 in 1 : vector<1x256xf32>, vector<1x256xf32>, vector<1x256xf32> -> vector<1x768xf32>
    %c753_i32 = arith.constant 753 : i32
    %85 = tpu.dynamic_rotate %3 by %c753_i32 dim 1 : vector<4x768xf32>, i32 -> vector<4x768xf32>
    %86 = vector.broadcast %84 : vector<1x768xf32> to vector<4x768xf32>
    %87 = arith.mulf %85, %86 : vector<4x768xf32>
    %c24_59 = arith.constant 24 : index
    %c0_60 = arith.constant 0 : index
    %88 = vector.load %arg9[%c24_59, %c0_60] : memref<36x768xf32, #tpu.memory_space<vmem>>, vector<4x768xf32>
    tpu.vector_store %arg9[%c24_59, %c0_60], %87 {strides = array<i32>} : memref<36x768xf32, #tpu.memory_space<vmem>>, vector<4x768xf32>,
    %c7_61 = arith.constant 7 : index
    %c0_62 = arith.constant 0 : index
    %89 = vector.load %arg7[%c7_61, %c0_62] : memref<9x256xf32, #tpu.memory_space<vmem>>, vector<1x256xf32>
    %90 = tpu.concatenate %89, %89, %89 in 1 : vector<1x256xf32>, vector<1x256xf32>, vector<1x256xf32> -> vector<1x768xf32>
    %c752_i32 = arith.constant 752 : i32
    %91 = tpu.dynamic_rotate %3 by %c752_i32 dim 1 : vector<4x768xf32>, i32 -> vector<4x768xf32>
    %92 = vector.broadcast %90 : vector<1x768xf32> to vector<4x768xf32>
    %93 = arith.mulf %91, %92 : vector<4x768xf32>
    %c28_63 = arith.constant 28 : index
    %c0_64 = arith.constant 0 : index
    %94 = vector.load %arg9[%c28_63, %c0_64] : memref<36x768xf32, #tpu.memory_space<vmem>>, vector<4x768xf32>
    tpu.vector_store %arg9[%c28_63, %c0_64], %93 {strides = array<i32>} : memref<36x768xf32, #tpu.memory_space<vmem>>, vector<4x768xf32>,
    %c8_65 = arith.constant 8 : index
    %c0_66 = arith.constant 0 : index
    %95 = vector.load %arg7[%c8_65, %c0_66] : memref<9x256xf32, #tpu.memory_space<vmem>>, vector<1x256xf32>
    %96 = tpu.concatenate %95, %95, %95 in 1 : vector<1x256xf32>, vector<1x256xf32>, vector<1x256xf32> -> vector<1x768xf32>
    %c751_i32 = arith.constant 751 : i32
    %97 = tpu.dynamic_rotate %3 by %c751_i32 dim 1 : vector<4x768xf32>, i32 -> vector<4x768xf32>
    %98 = vector.broadcast %96 : vector<1x768xf32> to vector<4x768xf32>
    %99 = arith.mulf %97, %98 : vector<4x768xf32>
    %c32_67 = arith.constant 32 : index
    %c0_68 = arith.constant 0 : index
    %100 = vector.load %arg9[%c32_67, %c0_68] : memref<36x768xf32, #tpu.memory_space<vmem>>, vector<4x768xf32>
    tpu.vector_store %arg9[%c32_67, %c0_68], %99 {strides = array<i32>} : memref<36x768xf32, #tpu.memory_space<vmem>>, vector<4x768xf32>,
    %c0_69 = arith.constant 0 : index
    %c0_70 = arith.constant 0 : index
    %101 = vector.load %arg4[%c0_69, %c0_70] : memref<8x36xf32, #tpu.memory_space<vmem>>, vector<8x36xf32>
    %c0_71 = arith.constant 0 : index
    %c0_72 = arith.constant 0 : index
    %102 = vector.load %arg9[%c0_71, %c0_72] : memref<36x768xf32, #tpu.memory_space<vmem>>, vector<36x768xf32>
    %cst_73 = arith.constant dense<0.000000e+00> : vector<8x768xf32>
    %103 = tpu.matmul %101, %102, %cst_73 {dimension_numbers = #tpu.dot_dimension_numbers<[1], [0], [0], [1], [0, 0, 1, 1], [], []>} : vector<8x36xf32>, vector<36x768xf32>, vector<8x768xf32> -> vector<8x768xf32>
    %104 = arith.addf %103, %51 : vector<8x768xf32>
    %105 = vector.extract_strided_slice %104 {offsets = [0, 0], sizes = [4, 768], strides = [1, 1]} : vector<8x768xf32> to vector<4x768xf32>
    %106 = math.tanh %105 : vector<4x768xf32>
    %107 = math.absf %106 : vector<4x768xf32>
    %108 = vector.extract_strided_slice %104 {offsets = [4, 0], sizes = [4, 768], strides = [1, 1]} : vector<8x768xf32> to vector<4x768xf32>
    %109 = arith.mulf %107, %108 : vector<4x768xf32>
    %c0_74 = arith.constant 0 : index
    %c0_75 = arith.constant 0 : index
    %c0_76 = arith.constant 0 : index
    %110 = vector.load %arg8[%c0_74, %c0_75, %c0_76] : memref<1x4x768xf32, #tpu.memory_space<vmem>>, vector<1x4x768xf32>
    %111 = vector.shape_cast %110 : vector<1x4x768xf32> to vector<4x768xf32>
    %112 = vector.shape_cast %109 : vector<4x768xf32> to vector<1x4x768xf32>
    tpu.vector_store %arg8[%c0_74, %c0_75, %c0_76], %112 {strides = array<i32>} : memref<1x4x768xf32, #tpu.memory_space<vmem>>, vector<1x4x768xf32>,
    return
  }
  func.func @transform_0(%arg0: i32, %arg1: i32) -> (i32, i32, i32) {
    %c0_i32 = arith.constant 0 : i32
    %c0_i32_0 = arith.constant 0 : i32
    %c0_i32_1 = arith.constant 0 : i32
    return %arg0, %c0_i32, %c0_i32_0 : i32, i32, i32
  }
  func.func @transform_1(%arg0: i32, %arg1: i32) -> (i32, i32, i32) {
    %c0_i32 = arith.constant 0 : i32
    %c0_i32_0 = arith.constant 0 : i32
    return %arg0, %c0_i32, %arg1 : i32, i32, i32
  }
  func.func @transform_2(%arg0: i32, %arg1: i32) -> (i32, i32) {
    %c0_i32 = arith.constant 0 : i32
    %c0_i32_0 = arith.constant 0 : i32
    %c0_i32_1 = arith.constant 0 : i32
    return %c0_i32, %c0_i32_0 : i32, i32
  }
  func.func @transform_3(%arg0: i32, %arg1: i32) -> (i32, i32) {
    %c0_i32 = arith.constant 0 : i32
    %c0_i32_0 = arith.constant 0 : i32
    %c0_i32_1 = arith.constant 0 : i32
    return %c0_i32, %c0_i32_0 : i32, i32
  }
  func.func @transform_4(%arg0: i32, %arg1: i32) -> (i32, i32) {
    %c0_i32 = arith.constant 0 : i32
    %c0_i32_0 = arith.constant 0 : i32
    %c0_i32_1 = arith.constant 0 : i32
    return %c0_i32, %c0_i32_0 : i32, i32
  }
  func.func @transform_5(%arg0: i32, %arg1: i32) -> (i32, i32) {
    %c0_i32 = arith.constant 0 : i32
    %c0_i32_0 = arith.constant 0 : i32
    %c0_i32_1 = arith.constant 0 : i32
    return %c0_i32, %c0_i32_0 : i32, i32
  }
  func.func @transform_6(%arg0: i32, %arg1: i32) -> (i32, i32, i32) {
    %c0_i32 = arith.constant 0 : i32
    %c0_i32_0 = arith.constant 0 : i32
    return %arg0, %c0_i32, %arg1 : i32, i32, i32
  }
}

</mosaic_0001>

<llo_original>
// kernel: neg.1
$region0: #{neg.1}
  #allocation0 [shape = 's32[1]{0}', space=sflag, size = 0x4, scoped, tag = 'scoped memory for neg.1']
  %s0 = inlined_call_operand.vmem [shape: f32[4,36], index: 0, kind: input, shape index: {}]
  %s1 = inlined_call_operand.vmem [shape: f32[4,36], index: 1, kind: output, shape index: {}]
  %v2 = vld [vmem:[%s0] sm:$0xf]
  %3 = xla_tuple %v2
  %4 = xla_tuple %3
  %v5 = vxor.u32 %v2, 2147483648
  %6 = xla_tuple %v5
  %7 = vst [vmem:[%s1] sm:$0xf] %v5

// kernel: correlation_unit_forward.1
$region0: #{correlation_unit_forward.1}
  #allocation0 [shape = 'u32[]', space=smem, size = 0x4, offset = 0x4, fixed_abs, tag = 'smem constant byte address 0x4 - core index']
  #allocation1 [shape = 'u32[144,128]{1,0:T(1,128)}', space=vmem, size = 0x12000, scoped, tag = 'internal scratch']
  #allocation2 [shape = 'f32[36,768]{1,0:T(8,128)}', space=vmem, size = 0x1e000, scoped, tag = 'scratch operand']
  %s0 = inlined_call_operand.vmem [shape: f32[2,4,256], index: 0, kind: input, shape index: {}]
  %s1 = inlined_call_operand.vmem [shape: f32[2,4,768], index: 1, kind: input, shape index: {}]
  %s2 = inlined_call_operand.vmem [shape: f32[8,36], index: 2, kind: input, shape index: {}]
  %s3 = inlined_call_operand.vmem [shape: f32[8,36], index: 3, kind: input, shape index: {}]
  %s4 = inlined_call_operand.vmem [shape: f32[8,1], index: 4, kind: input, shape index: {}]
  %s5 = inlined_call_operand.vmem [shape: f32[9,256], index: 5, kind: input, shape index: {}]
  %s6 = inlined_call_operand.vmem [shape: f32[2,4,768], index: 6, kind: output, shape index: {}]
  %s7 = sld [smem:[#allocation0]]
  $region57: #{correlation_unit_forward.1} parent=0
    _
  %s9 = ssub.s32 1, %s7
  %s10 = scalar_select 0, %s9, %s7
  loop: start=0, step=1, limit=4
  $region2: #{correlation_unit_forward.1} parent=0 // loop_pre_header
    _
  $region3: #{correlation_unit_forward.1} parent=0 // loop_header
    %s12 = sphi 0, %s16
    %p13 = scmp.ge.s32.totalorder %s12, 4
    %s19 = sphi 0, %s31
    %s20 = sphi 0, %s27
    %s21 = sphi 0, %s19
    %s22 = sphi 0, %s20
    %s23 = sphi 0, %s21
    %s24 = sphi 0, %s22
    %s34 = sphi 0, %s36
    %s37 = sphi 0, %s34
    %s38 = sphi 0, %s37
    %s54 = sphi 0, %s38
    %s62 = sphi 0, %s64
    %s65 = sphi 0, %s62
    %s66 = sphi 0, %s65
    %s82 = sphi 0, %s66
    %s86 = sphi 0, %s86
    %s88 = sphi 0, %s86
    %s89 = sphi 0, %s88
    %s103 = sphi 0, %s89
    %s107 = sphi 0, %s107
    %s109 = sphi 0, %s107
    %s110 = sphi 0, %s109
    %s124 = sphi 0, %s110
    %s128 = sphi 0, %s128
    %s130 = sphi 0, %s128
    %s131 = sphi 0, %s130
    %s145 = sphi 0, %s131
    %s149 = sphi 0, %s149
    %s151 = sphi 0, %s149
    %s152 = sphi 0, %s151
    %s166 = sphi 0, %s152
    %s174 = sphi 0, %s176
    %s177 = sphi 0, %s174
    %s178 = sphi 0, %s177
    %s194 = sphi 0, %s178
  $region4: #{correlation_unit_forward.1} parent=0 // loop_header_branch
    %15 = sbr.rel (%p13) target = $region8
  $region5: #{correlation_unit_forward.1} parent=0 // loop_body
    %s17 = ssub.s32 %s12, 1
    %s18 = ssub.s32 %s12, 2
    %s25 = sadd.s32 1, %s20
    %p26 = scmp.ge.s32.totalorder %s25, 1
    %s27 = scalar_select %p26, 0, %s25
    %s28 = sadd.s32 1, %s19
    %s29 = scalar_select %p26, %s28, %s19
    %p30 = scmp.ge.s32.totalorder %s29, 2
    %s31 = scalar_select %p30, 0, %s29
    %s32 = ssub.s32 %s19, %s31
    %p33 = scmp.eq.s32.totalorder %s32, 0
    %s35 = sadd.s32 %s34, 1
    %s36 = scalar_select %p33, %s34, %s35
    %p39 = pneg %p33
    %p40 = scmp.eq.s32.totalorder %s12, 1
    %p41 = por %p39, %p40
    %p42 = scmp.ne.s32.totalorder %s34, %s37
    %p43 = scmp.eq.s32.totalorder %s12, 0
    %p44 = por %p42, %p43
    %p45 = scmp.ne.s32.totalorder %s34, %s37
    %p46 = scmp.eq.s32.totalorder %s17, 1
    %p47 = por %p45, %p46
    %p48 = scmp.ne.s32.totalorder %s37, %s38
    %p49 = scmp.eq.s32.totalorder %s17, 0
    %p50 = por %p48, %p49
    %p51 = scmp.ne.s32.totalorder %s37, %s38
    %p52 = scmp.eq.s32.totalorder %s18, 1
    %p53 = por %p51, %p52
    %p55 = scmp.ne.s32.totalorder %s38, %s54
    %p56 = scmp.eq.s32.totalorder %s18, 0
    %p57 = por %p55, %p56
    %s58 = ssub.s32 %s19, %s31
    %s59 = ssub.s32 %s20, %s27
    %s60 = sor.u32 %s58, %s59
    %p61 = scmp.eq.s32.totalorder %s60, 0
    %s63 = sadd.s32 %s62, 1
    %s64 = scalar_select %p61, %s62, %s63
    %p67 = pneg %p61
    %p68 = scmp.eq.s32.totalorder %s12, 1
    %p69 = por %p67, %p68
    %p70 = scmp.ne.s32.totalorder %s62, %s65
    %p71 = scmp.eq.s32.totalorder %s12, 0
    %p72 = por %p70, %p71
    %p73 = scmp.ne.s32.totalorder %s62, %s65
    %p74 = scmp.eq.s32.totalorder %s17, 1
    %p75 = por %p73, %p74
    %p76 = scmp.ne.s32.totalorder %s65, %s66
    %p77 = scmp.eq.s32.totalorder %s17, 0
    %p78 = por %p76, %p77
    %p79 = scmp.ne.s32.totalorder %s65, %s66
    %p80 = scmp.eq.s32.totalorder %s18, 1
    %p81 = por %p79, %p80
    %p83 = scmp.ne.s32.totalorder %s66, %s82
    %p84 = scmp.eq.s32.totalorder %s18, 0
    %p85 = por %p83, %p84
    %s87 = sadd.s32 %s86, 1
    %p90 = scmp.eq.s32.totalorder %s12, 1
    %p91 = scmp.ne.s32.totalorder %s86, %s88
    %p92 = scmp.eq.s32.totalorder %s12, 0
    %p93 = por %p91, %p92
    %p94 = scmp.ne.s32.totalorder %s86, %s88
    %p95 = scmp.eq.s32.totalorder %s17, 1
    %p96 = por %p94, %p95
    %p97 = scmp.ne.s32.totalorder %s88, %s89
    %p98 = scmp.eq.s32.totalorder %s17, 0
    %p99 = por %p97, %p98
    %p100 = scmp.ne.s32.totalorder %s88, %s89
    %p101 = scmp.eq.s32.totalorder %s18, 1
    %p102 = por %p100, %p101
    %p104 = scmp.ne.s32.totalorder %s89, %s103
    %p105 = scmp.eq.s32.totalorder %s18, 0
    %p106 = por %p104, %p105
    %s108 = sadd.s32 %s107, 1
    %p111 = scmp.eq.s32.totalorder %s12, 1
    %p112 = scmp.ne.s32.totalorder %s107, %s109
    %p113 = scmp.eq.s32.totalorder %s12, 0
    %p114 = por %p112, %p113
    %p115 = scmp.ne.s32.totalorder %s107, %s109
    %p116 = scmp.eq.s32.totalorder %s17, 1
    %p117 = por %p115, %p116
    %p118 = scmp.ne.s32.totalorder %s109, %s110
    %p119 = scmp.eq.s32.totalorder %s17, 0
    %p120 = por %p118, %p119
    %p121 = scmp.ne.s32.totalorder %s109, %s110
    %p122 = scmp.eq.s32.totalorder %s18, 1
    %p123 = por %p121, %p122
    %p125 = scmp.ne.s32.totalorder %s110, %s124
    %p126 = scmp.eq.s32.totalorder %s18, 0
    %p127 = por %p125, %p126
    %s129 = sadd.s32 %s128, 1
    %p132 = scmp.eq.s32.totalorder %s12, 1
    %p133 = scmp.ne.s32.totalorder %s128, %s130
    %p134 = scmp.eq.s32.totalorder %s12, 0
    %p135 = por %p133, %p134
    %p136 = scmp.ne.s32.totalorder %s128, %s130
    %p137 = scmp.eq.s32.totalorder %s17, 1
    %p138 = por %p136, %p137
    %p139 = scmp.ne.s32.totalorder %s130, %s131
    %p140 = scmp.eq.s32.totalorder %s17, 0
    %p141 = por %p139, %p140
    %p142 = scmp.ne.s32.totalorder %s130, %s131
    %p143 = scmp.eq.s32.totalorder %s18, 1
    %p144 = por %p142, %p143
    %p146 = scmp.ne.s32.totalorder %s131, %s145
    %p147 = scmp.eq.s32.totalorder %s18, 0
    %p148 = por %p146, %p147
    %s150 = sadd.s32 %s149, 1
    %p153 = scmp.eq.s32.totalorder %s12, 1
    %p154 = scmp.ne.s32.totalorder %s149, %s151
    %p155 = scmp.eq.s32.totalorder %s12, 0
    %p156 = por %p154, %p155
    %p157 = scmp.ne.s32.totalorder %s149, %s151
    %p158 = scmp.eq.s32.totalorder %s17, 1
    %p159 = por %p157, %p158
    %p160 = scmp.ne.s32.totalorder %s151, %s152
    %p161 = scmp.eq.s32.totalorder %s17, 0
    %p162 = por %p160, %p161
    %p163 = scmp.ne.s32.totalorder %s151, %s152
    %p164 = scmp.eq.s32.totalorder %s18, 1
    %p165 = por %p163, %p164
    %p167 = scmp.ne.s32.totalorder %s152, %s166
    %p168 = scmp.eq.s32.totalorder %s18, 0
    %p169 = por %p167, %p168
    %s170 = ssub.s32 %s19, %s31
    %s171 = ssub.s32 %s20, %s27
    %s172 = sor.u32 %s170, %s171
    %p173 = scmp.eq.s32.totalorder %s172, 0
    %s175 = sadd.s32 %s174, 1
    %s176 = scalar_select %p173, %s174, %s175
    %p179 = pneg %p173
    %p180 = scmp.eq.s32.totalorder %s12, 1
    %p181 = por %p179, %p180
    %p182 = scmp.ne.s32.totalorder %s174, %s177
    %p183 = scmp.eq.s32.totalorder %s12, 0
    %p184 = por %p182, %p183
    %p185 = scmp.ne.s32.totalorder %s174, %s177
    %p186 = scmp.eq.s32.totalorder %s17, 1
    %p187 = por %p185, %p186
    %p188 = scmp.ne.s32.totalorder %s177, %s178
    %p189 = scmp.eq.s32.totalorder %s17, 0
    %p190 = por %p188, %p189
    %p191 = scmp.ne.s32.totalorder %s177, %s178
    %p192 = scmp.eq.s32.totalorder %s18, 1
    %p193 = por %p191, %p192
    %p195 = scmp.ne.s32.totalorder %s178, %s194
    %p196 = scmp.eq.s32.totalorder %s18, 0
    %p197 = por %p195, %p196
    %p198 = scmp.le.s32.totalorder 1, %s12
    %p199 = scmp.lt.s32.totalorder %s12, 3
    %p200 = pnand %p198, %p199
    %p201 = pneg %p200
    // Predicated region
    $region9: #{correlation_unit_forward.1} parent=5 // pred_check
      _
    $region10: #{correlation_unit_forward.1} parent=5 // pred_check_branch
      %203 = sbr.rel (%p200) target = $region12
    $region11: #{correlation_unit_forward.1} parent=5 // pred_region
      %s204 = ssub.s32 %s12, 1
      // Predicated region
      $region13: #{correlation_unit_forward.1} parent=11 // pred_check
        %p205 = pneg %p99
      $region14: #{correlation_unit_forward.1} parent=11 // pred_check_branch
        %207 = sbr.rel (%p205) target = $region16
      $region15: #{correlation_unit_forward.1} parent=11 // pred_region
        _
      $region16: #{correlation_unit_forward.1} parent=11 // pred_fallthru
        _
      // Predicated region
      $region17: #{correlation_unit_forward.1} parent=11 // pred_check
        %p208 = pneg %p120
      $region18: #{correlation_unit_forward.1} parent=11 // pred_check_branch
        %210 = sbr.rel (%p208) target = $region20
      $region19: #{correlation_unit_forward.1} parent=11 // pred_region
        _
      $region20: #{correlation_unit_forward.1} parent=11 // pred_fallthru
        _
      // Predicated region
      $region21: #{correlation_unit_forward.1} parent=11 // pred_check
        %p211 = pneg %p141
      $region22: #{correlation_unit_forward.1} parent=11 // pred_check_branch
        %213 = sbr.rel (%p211) target = $region24
      $region23: #{correlation_unit_forward.1} parent=11 // pred_region
        _
      $region24: #{correlation_unit_forward.1} parent=11 // pred_fallthru
        _
      // Predicated region
      $region25: #{correlation_unit_forward.1} parent=11 // pred_check
        %p214 = pneg %p162
      $region26: #{correlation_unit_forward.1} parent=11 // pred_check_branch
        %216 = sbr.rel (%p214) target = $region28
      $region27: #{correlation_unit_forward.1} parent=11 // pred_region
        _
      $region28: #{correlation_unit_forward.1} parent=11 // pred_fallthru
        _
    $region12: #{correlation_unit_forward.1} parent=5 // pred_fallthru
      _
    %p217 = scmp.lt.s32.totalorder %s12, 2
    // Predicated region
    $region29: #{correlation_unit_forward.1} parent=5 // pred_check
      %p218 = pneg %p217
    $region30: #{correlation_unit_forward.1} parent=5 // pred_check_branch
      %220 = sbr.rel (%p218) target = $region32
    $region31: #{correlation_unit_forward.1} parent=5 // pred_region
      // Predicated region
      $region33: #{correlation_unit_forward.1} parent=31 // pred_check
        %p221 = pneg %p44
      $region34: #{correlation_unit_forward.1} parent=31 // pred_check_branch
        %223 = sbr.rel (%p221) target = $region36
      $region35: #{correlation_unit_forward.1} parent=31 // pred_region
        %p224 = scmp.lt.s32.totalorder %s19, 1
        %s225 = scalar_select %p224, %s19, 1
        %s226 = smul.addr %s225, 2
        %s227 = smul.addr %s226, 4
        %s228 = scalar_lea.vmem %s0, %s227
      $region36: #{correlation_unit_forward.1} parent=31 // pred_fallthru
        _
      // Predicated region
      $region37: #{correlation_unit_forward.1} parent=31 // pred_check
        %p229 = pneg %p72
      $region38: #{correlation_unit_forward.1} parent=31 // pred_check_branch
        %231 = sbr.rel (%p229) target = $region40
      $region39: #{correlation_unit_forward.1} parent=31 // pred_region
        %s232 = smul.u32 6, %s20
        %p233 = scmp.lt.s32.totalorder %s19, 1
        %s234 = scalar_select %p233, %s19, 1
        %p235 = scmp.lt.s32.totalorder %s232, 5
        %s236 = scalar_select %p235, %s232, 5
        %s237 = smul.addr %s234, 6
        %s238 = sadd.s32 %s236, %s237
        %s239 = smul.addr %s238, 4
        %s240 = scalar_lea.vmem %s1, %s239
        %s241 = smul.u32 6, %s20
      $region40: #{correlation_unit_forward.1} parent=31 // pred_fallthru
        _
    $region32: #{correlation_unit_forward.1} parent=5 // pred_fallthru
      _
    %p242 = scmp.le.s32.totalorder 1, %s12
    %p243 = scmp.lt.s32.totalorder %s12, 3
    %p244 = pnand %p242, %p243
    %p245 = pneg %p244
    // Predicated region
    $region41: #{correlation_unit_forward.1} parent=5 // pred_check
      _
    $region42: #{correlation_unit_forward.1} parent=5 // pred_check_branch
      %247 = sbr.rel (%p244) target = $region44
    $region43: #{correlation_unit_forward.1} parent=5 // pred_region
      %s248 = ssub.s32 %s12, 1
      %p249 = scmp.lt.s32.totalorder %s21, 1
      %s250 = scalar_select %p249, %s21, 1
      %s251 = smul.addr %s250, 2
      %s252 = smul.addr %s251, 4
      %s253 = scalar_lea.vmem %s0, %s252
      %p254 = pneg %p50
      %p255 = pneg %p47
      %s256 = smul.u32 6, %s22
      %p257 = scmp.lt.s32.totalorder %s21, 1
      %s258 = scalar_select %p257, %s21, 1
      %p259 = scmp.lt.s32.totalorder %s256, 5
      %s260 = scalar_select %p259, %s256, 5
      %s261 = smul.addr %s258, 6
      %s262 = sadd.s32 %s260, %s261
      %s263 = smul.addr %s262, 4
      %s264 = scalar_lea.vmem %s1, %s263
      %p265 = pneg %p78
      %p266 = pneg %p75
      %p267 = pneg %p99
      %p268 = pneg %p96
      %p269 = pneg %p120
      %p270 = pneg %p117
      %p271 = pneg %p141
      %p272 = pneg %p138
      %p273 = pneg %p162
      %p274 = pneg %p159
      %p275 = pneg %p190
      %p276 = pneg %p187
      %s277 = smul.u32 6, %s22
      %p278 = scmp.lt.s32.totalorder %s21, 1
      %s279 = scalar_select %p278, %s21, 1
      %p280 = scmp.lt.s32.totalorder %s277, 5
      %s281 = scalar_select %p280, %s277, 5
      %s282 = smul.addr %s279, 6
      %s283 = sadd.s32 %s281, %s282
      %s284 = smul.addr %s283, 4
      %s285 = scalar_lea.vmem %s6, %s284
      %p286 = scmp.lt.s32.totalorder %s21, 1
      %s287 = scalar_select %p286, %s21, 1
      %s288 = smul.addr %s287, 2
      %s289 = smul.addr %s288, 4
      %s290 = scalar_lea.vmem %s0, %s289
      %s291 = smul.u32 6, %s22
      %p292 = scmp.lt.s32.totalorder %s21, 1
      %s293 = scalar_select %p292, %s21, 1
      %p294 = scmp.lt.s32.totalorder %s291, 5
      %s295 = scalar_select %p294, %s291, 5
      %s296 = smul.addr %s293, 6
      %s297 = sadd.s32 %s295, %s296
      %s298 = smul.addr %s297, 4
      %s299 = scalar_lea.vmem %s1, %s298
      %s300 = smul.u32 6, %s22
      %s301 = smul.u32 6, %s22
      %p302 = scmp.lt.s32.totalorder %s21, 1
      %s303 = scalar_select %p302, %s21, 1
      %p304 = scmp.lt.s32.totalorder %s301, 5
      %s305 = scalar_select %p304, %s301, 5
      %s306 = smul.addr %s303, 6
      %s307 = sadd.s32 %s305, %s306
      %s308 = smul.addr %s307, 4
      %s309 = scalar_lea.vmem %s6, %s308
      %s310 = smul.u32 6, %s22
      %v311 = vld [vmem:[%s290] sm:$0xff]
      %v312 = vld [vmem:[%s299] sm:$0xff]
      %v313 = vld [vmem:[%s299 + $0x8] sm:$0xff]
      %v314 = vld [vmem:[%s299 + $0x10] sm:$0xff]
      %v316 = vcombine.high %v311, %v311
      %318 = vrot.lane.b32.xlu0 %v311, 17
      %v319 = vpop.permute.xlu0 %318
      %320 = vrot.lane.b32.xlu0 %v316, 17
      %v321 = vpop.permute.xlu0 %320
      %v322 = vlaneseq
      %v323 = vand.u32 %v322, 127
      %vm324 = vcmp.lt.s32.totalorder %v323, 17
      %v325 = vsel %vm324, %v319, %v321
      %v326 = vsel %vm324, %v321, %v319
      %v327 = vld [vmem:[%s5] ss:$8 sm:$0x3]
      %v329 = vlaneseq
      %v330 = vshrl.u32 %v329, 7
      %v331 = vsub.s32 0, %v330
      %v332 = vrot.slane %v327, %v331
      %v333 = vlaneseq
      %v334 = vshrl.u32 %v333, 7
      %v335 = vsub.s32 1, %v334
      %v336 = vrot.slane %v327, %v335
      %v339 = vmul.f32 %v326, %v332
      %v340 = vmul.f32 %v325, %v336
      %341 = vst [vmem:[#allocation2] sm:$0xf] %v339
      %342 = vst [vmem:[#allocation2 + $0x8] sm:$0xf] %v340
      %343 = vrot.lane.b32.xlu0 %v311, 16
      %v344 = vpop.permute.xlu0 %343
      %345 = vrot.lane.b32.xlu0 %v316, 16
      %v346 = vpop.permute.xlu0 %345
      %vm347 = vcmp.lt.s32.totalorder %v323, 16
      %v348 = vsel %vm347, %v344, %v346
      %v349 = vsel %vm347, %v346, %v344
      %s350 = scalar_lea.vmem %s5, 1
      %v351 = vld [vmem:[%s350] ss:$8 sm:$0x3]
      %v353 = vlaneseq
      %v354 = vshrl.u32 %v353, 7
      %v355 = vsub.s32 0, %v354
      %v356 = vrot.slane %v351, %v355
      %v357 = vlaneseq
      %v358 = vshrl.u32 %v357, 7
      %v359 = vsub.s32 1, %v358
      %v360 = vrot.slane %v351, %v359
      %v363 = vmul.f32 %v349, %v356
      %v364 = vmul.f32 %v348, %v360
      %v367 = vrot.slane %v363, 4
      %v368 = vrot.slane %v364, 4
      %371 = vst [vmem:[#allocation2] sm:$0xf0] %v367
      %372 = vst [vmem:[#allocation2 + $0x8] sm:$0xf0] %v368
      %373 = vrot.lane.b32.xlu0 %v311, 15
      %v374 = vpop.permute.xlu0 %373
      %375 = vrot.lane.b32.xlu0 %v316, 15
      %v376 = vpop.permute.xlu0 %375
      %vm377 = vcmp.lt.s32.totalorder %v323, 15
      %v378 = vsel %vm377, %v374, %v376
      %v379 = vsel %vm377, %v376, %v374
      %s380 = scalar_lea.vmem %s5, 2
      %v381 = vld [vmem:[%s380] ss:$8 sm:$0x3]
      %v383 = vlaneseq
      %v384 = vshrl.u32 %v383, 7
      %v385 = vsub.s32 0, %v384
      %v386 = vrot.slane %v381, %v385
      %v387 = vlaneseq
      %v388 = vshrl.u32 %v387, 7
      %v389 = vsub.s32 1, %v388
      %v390 = vrot.slane %v381, %v389
      %v393 = vmul.f32 %v379, %v386
      %v394 = vmul.f32 %v378, %v390
      %395 = vst [vmem:[#allocation2 + $0x30] sm:$0xf] %v393
      %396 = vst [vmem:[#allocation2 + $0x38] sm:$0xf] %v394
      %397 = vrot.lane.b32.xlu0 %v311, 1
      %v398 = vpop.permute.xlu0 %397
      %399 = vrot.lane.b32.xlu0 %v316, 1
      %v400 = vpop.permute.xlu0 %399
      %vm401 = vcmp.lt.s32.totalorder %v323, 1
      %v402 = vsel %vm401, %v398, %v400
      %v403 = vsel %vm401, %v400, %v398
      %s404 = scalar_lea.vmem %s5, 3
      %v405 = vld [vmem:[%s404] ss:$8 sm:$0x3]
      %v407 = vlaneseq
      %v408 = vshrl.u32 %v407, 7
      %v409 = vsub.s32 0, %v408
      %v410 = vrot.slane %v405, %v409
      %v411 = vlaneseq
      %v412 = vshrl.u32 %v411, 7
      %v413 = vsub.s32 1, %v412
      %v414 = vrot.slane %v405, %v413
      %v417 = vmul.f32 %v403, %v410
      %v418 = vmul.f32 %v402, %v414
      %v421 = vrot.slane %v417, 4
      %v422 = vrot.slane %v418, 4
      %425 = vst [vmem:[#allocation2 + $0x30] sm:$0xf0] %v421
      %426 = vst [vmem:[#allocation2 + $0x38] sm:$0xf0] %v422
      %427 = vst [vmem:[#allocation2 + $0x60] sm:$0xf] %v311
      %428 = vst [vmem:[#allocation2 + $0x68] sm:$0xf] %v316
      %429 = vrot.lane.b32.xlu0 %v311, 127
      %v430 = vpop.permute.xlu0 %429
      %431 = vrot.lane.b32.xlu0 %v316, 127
      %v432 = vpop.permute.xlu0 %431
      %vm433 = vcmp.lt.s32.totalorder %v323, 127
      %v434 = vsel %vm433, %v430, %v432
      %v435 = vsel %vm433, %v432, %v430
      %s436 = scalar_lea.vmem %s5, 5
      %v437 = vld [vmem:[%s436] ss:$8 sm:$0x3]
      %v439 = vlaneseq
      %v440 = vshrl.u32 %v439, 7
      %v441 = vsub.s32 0, %v440
      %v442 = vrot.slane %v437, %v441
      %v443 = vlaneseq
      %v444 = vshrl.u32 %v443, 7
      %v445 = vsub.s32 1, %v444
      %v446 = vrot.slane %v437, %v445
      %v449 = vmul.f32 %v434, %v442
      %v450 = vmul.f32 %v435, %v446
      %v453 = vrot.slane %v449, 4
      %v454 = vrot.slane %v450, 4
      %457 = vst [vmem:[#allocation2 + $0x60] sm:$0xf0] %v453
      %458 = vst [vmem:[#allocation2 + $0x68] sm:$0xf0] %v454
      %459 = vrot.lane.b32.xlu0 %v311, 113
      %v460 = vpop.permute.xlu0 %459
      %461 = vrot.lane.b32.xlu0 %v316, 113
      %v462 = vpop.permute.xlu0 %461
      %vm463 = vcmp.lt.s32.totalorder %v323, 113
      %v464 = vsel %vm463, %v460, %v462
      %v465 = vsel %vm463, %v462, %v460
      %s466 = scalar_lea.vmem %s5, 6
      %v467 = vld [vmem:[%s466] ss:$8 sm:$0x3]
      %v469 = vlaneseq
      %v470 = vshrl.u32 %v469, 7
      %v471 = vsub.s32 0, %v470
      %v472 = vrot.slane %v467, %v471
      %v473 = vlaneseq
      %v474 = vshrl.u32 %v473, 7
      %v475 = vsub.s32 1, %v474
      %v476 = vrot.slane %v467, %v475
      %v479 = vmul.f32 %v464, %v472
      %v480 = vmul.f32 %v465, %v476
      %481 = vst [vmem:[#allocation2 + $0x90] sm:$0xf] %v479
      %482 = vst [vmem:[#allocation2 + $0x98] sm:$0xf] %v480
      %483 = vrot.lane.b32.xlu0 %v311, 112
      %v484 = vpop.permute.xlu0 %483
      %485 = vrot.lane.b32.xlu0 %v316, 112
      %v486 = vpop.permute.xlu0 %485
      %vm487 = vcmp.lt.s32.totalorder %v323, 112
      %v488 = vsel %vm487, %v484, %v486
      %v489 = vsel %vm487, %v486, %v484
      %s490 = scalar_lea.vmem %s5, 7
      %v491 = vld [vmem:[%s490] ss:$8 sm:$0x3]
      %v493 = vlaneseq
      %v494 = vshrl.u32 %v493, 7
      %v495 = vsub.s32 0, %v494
      %v496 = vrot.slane %v491, %v495
      %v497 = vlaneseq
      %v498 = vshrl.u32 %v497, 7
      %v499 = vsub.s32 1, %v498
      %v500 = vrot.slane %v491, %v499
      %v503 = vmul.f32 %v488, %v496
      %v504 = vmul.f32 %v489, %v500
      %v507 = vrot.slane %v503, 4
      %v508 = vrot.slane %v504, 4
      %511 = vst [vmem:[#allocation2 + $0x90] sm:$0xf0] %v507
      %512 = vst [vmem:[#allocation2 + $0x98] sm:$0xf0] %v508
      %513 = vrot.lane.b32.xlu0 %v311, 111
      %v514 = vpop.permute.xlu0 %513
      %515 = vrot.lane.b32.xlu0 %v316, 111
      %v516 = vpop.permute.xlu0 %515
      %vm517 = vcmp.lt.s32.totalorder %v323, 111
      %v518 = vsel %vm517, %v514, %v516
      %v519 = vsel %vm517, %v516, %v514
      %s520 = scalar_lea.vmem %s5, 16
      %v521 = vld [vmem:[%s520] ss:$8 sm:$0x3]
      %v523 = vlaneseq
      %v524 = vshrl.u32 %v523, 7
      %v525 = vsub.s32 0, %v524
      %v526 = vrot.slane %v521, %v525
      %v527 = vlaneseq
      %v528 = vshrl.u32 %v527, 7
      %v529 = vsub.s32 1, %v528
      %v530 = vrot.slane %v521, %v529
      %v533 = vmul.f32 %v518, %v526
      %v534 = vmul.f32 %v519, %v530
      %535 = vst [vmem:[#allocation2 + $0xc0] sm:$0xf] %v533
      %536 = vst [vmem:[#allocation2 + $0xc8] sm:$0xf] %v534
      %v537 = vld [vmem:[%s3] sm:$0xff]
      %v538 = vld [vmem:[#allocation2] sm:$0xff]
      %v539 = vld [vmem:[#allocation2 + $0x8] sm:$0xff]
      %v540 = vld [vmem:[#allocation2 + $0x30] sm:$0xff]
      %v541 = vld [vmem:[#allocation2 + $0x38] sm:$0xff]
      %v542 = vld [vmem:[#allocation2 + $0x60] sm:$0xff]
      %v543 = vld [vmem:[#allocation2 + $0x68] sm:$0xff]
      %v544 = vld [vmem:[#allocation2 + $0x90] sm:$0xff]
      %v545 = vld [vmem:[#allocation2 + $0x98] sm:$0xff]
      %v546 = vld [vmem:[#allocation2 + $0xc0] sm:$0xf]
      %v547 = vld [vmem:[#allocation2 + $0xc8] sm:$0xf]
      %v548 = vld [vmem:[%s4] sm:$0xff]
      %550 = vset.pattern.permute.xlu0 0
      %551 = vperm.xlu0 %550, %v548
      %v552 = vpop.permute.xlu0 %551
      %vm554 = vcmask 293888
      %v556 = vsel %vm554, %v537, 0
      %vm558 = vcmask 1043456
      %v560 = vsel %vm558, %v546, 0
      %v563 = vsel %vm558, %v547, 0
      %565 = vmatprep.subr.mxu0 %v539
      %566 = vmatpush1.msra.mxu0 %v538
      %567 = vmatprep.subr.mxu0 %v541
      %568 = vmatpush1.msra.mxu0 %v540
      %569 = vmatprep.subr.mxu0 %v543
      %570 = vmatpush1.msra.mxu0 %v542
      %571 = vmatprep.subr.mxu0 %v545
      %572 = vmatpush1.msra.mxu0 %v544
      %573 = vmatprep.subr.mxu0 %v563
      %574 = vmatpush1.msra.mxu0 %v560
      %575 = vmatprep.subr.mxu0 0.0
      %576 = vmatpush1.msra.mxu0 0.0
      %577 = vmatprep.subr.mxu0 0.0
      %578 = vmatpush1.msra.mxu0 0.0
      %579 = vmatprep.subr.mxu0 0.0
      %580 = vmatpush1.msra.mxu0 0.0
      %581 = vmatprep.subr.mxu0 0.0
      %582 = vmatpush1.msra.mxu0 0.0
      %583 = vmatprep.subr.mxu0 0.0
      %584 = vmatpush1.msra.mxu0 0.0
      %585 = vmatprep.subr.mxu0 0.0
      %586 = vmatpush1.msra.mxu0 0.0
      %587 = vmatprep.subr.mxu0 0.0
      %588 = vmatpush1.msra.mxu0 0.0
      %589 = vmatprep.subr.mxu0 0.0
      %590 = vmatpush1.msra.mxu0 0.0
      %591 = vmatprep.subr.mxu0 0.0
      %592 = vmatpush1.msra.mxu0 0.0
      %593 = vmatprep.subr.mxu0 0.0
      %594 = vmatpush1.msra.mxu0 0.0
      %595 = vmatprep.subr.mxu0 0.0
      %596 = vmatpush1.msra.mxu0 0.0
      %597 = vmatprep.subr.mxu0 0.0
      %598 = vmatpush1.msra.mxu0 0.0
      %599 = vmatprep.subr.mxu0 0.0
      %600 = vmatpush1.msra.mxu0 0.0
      %601 = vmatprep.subr.mxu0 0.0
      %602 = vmatpush1.msra.mxu0 0.0
      %603 = vmatprep.subr.mxu0 0.0
      %604 = vmatpush1.msra.mxu0 0.0
      %605 = vmatprep.subr.mxu0 0.0
      %606 = vmatpush1.msra.mxu0 0.0
      %607 = vmatprep.subr.mxu0 0.0
      %608 = vmatpush1.msra.mxu0 0.0
      %609 = vmatprep.subr.mxu0 0.0
      %610 = vmatpush1.msra.mxu0 0.0
      %611 = vmatprep.subr.mxu0 0.0
      %612 = vmatpush1.msra.mxu0 0.0
      %613 = vmatprep.subr.mxu0 0.0
      %614 = vmatpush1.msra.mxu0 0.0
      %615 = vmatprep.subr.mxu0 0.0
      %616 = vmatpush1.msra.mxu0 0.0
      %617 = vmatprep.subr.mxu0 0.0
      %618 = vmatpush1.msra.mxu0 0.0
      %619 = vmatprep.subr.mxu0 0.0
      %620 = vmatpush1.msra.mxu0 0.0
      %621 = vmatprep.subr.mxu0 0.0
      %622 = vmatpush1.msra.mxu0 0.0
      %623 = vmatprep.subr.mxu0 0.0
      %624 = vmatpush1.msra.mxu0 0.0
      %625 = vmatprep.subr.mxu0 0.0
      %626 = vmatpush1.msra.mxu0 0.0
      %627 = vmatprep.subr.mxu0 0.0
      %628 = vmatpush1.msra.mxu0 0.0
      %629 = vmatprep.mubr.f32.mxu0 0.0
      %630 = vmatmul.mubr.f32.gmra.mrb[0].mxu0 %v556
      %v631 = vpop.f32.mrb[0].mxu0
      %v632 = vadd.f32 %v552, %v631
      %v633 = vpop.f32.mrb[0].mxu0
      %v634 = vadd.f32 %v552, %v633
      %635 = vdwg.mxu0
      %v636 = vld [vmem:[%s5] ss:$8 sm:$0x3]
      %v638 = vlaneseq
      %v639 = vshrl.u32 %v638, 7
      %v640 = vsub.s32 0, %v639
      %v641 = vrot.slane %v636, %v640
      %v642 = vlaneseq
      %v643 = vshrl.u32 %v642, 7
      %v644 = vsub.s32 1, %v643
      %v645 = vrot.slane %v636, %v644
      %v651 = vcombine.high %v312, %v312
      %v652 = vcombine.high %v313, %v313
      %v653 = vcombine.high %v314, %v314
      %657 = vrot.lane.b32.xlu0 %v312, 17
      %v658 = vpop.permute.xlu0 %657
      %659 = vrot.lane.b32.xlu0 %v651, 17
      %v660 = vpop.permute.xlu0 %659
      %661 = vrot.lane.b32.xlu0 %v313, 17
      %v662 = vpop.permute.xlu0 %661
      %663 = vrot.lane.b32.xlu0 %v652, 17
      %v664 = vpop.permute.xlu0 %663
      %665 = vrot.lane.b32.xlu0 %v314, 17
      %v666 = vpop.permute.xlu0 %665
      %667 = vrot.lane.b32.xlu0 %v653, 17
      %v668 = vpop.permute.xlu0 %667
      %v669 = vsel %vm324, %v666, %v668
      %v670 = vsel %vm324, %v664, %v666
      %v671 = vsel %vm324, %v662, %v664
      %v672 = vsel %vm324, %v660, %v662
      %v673 = vsel %vm324, %v658, %v660
      %v674 = vsel %vm324, %v668, %v658
      %v675 = vlaneseq
      %v676 = vshrl.u32 %v675, 7
      %v677 = vsub.s32 0, %v676
      %v678 = vrot.slane %v641, %v677
      %v679 = vlaneseq
      %v680 = vshrl.u32 %v679, 7
      %v681 = vsub.s32 0, %v680
      %v682 = vrot.slane %v645, %v681
      %v683 = vmul.f32 %v674, %v678
      %v684 = vmul.f32 %v673, %v682
      %v685 = vmul.f32 %v672, %v678
      %v686 = vmul.f32 %v671, %v682
      %v687 = vmul.f32 %v670, %v678
      %v688 = vmul.f32 %v669, %v682
      %689 = vst [vmem:[#allocation2] sm:$0xf] %v683
      %690 = vst [vmem:[#allocation2 + $0x8] sm:$0xf] %v684
      %691 = vst [vmem:[#allocation2 + $0x10] sm:$0xf] %v685
      %692 = vst [vmem:[#allocation2 + $0x18] sm:$0xf] %v686
      %693 = vst [vmem:[#allocation2 + $0x20] sm:$0xf] %v687
      %694 = vst [vmem:[#allocation2 + $0x28] sm:$0xf] %v688
      %v695 = vld [vmem:[%s350] ss:$8 sm:$0x3]
      %v697 = vlaneseq
      %v698 = vshrl.u32 %v697, 7
      %v699 = vsub.s32 0, %v698
      %v700 = vrot.slane %v695, %v699
      %v701 = vlaneseq
      %v702 = vshrl.u32 %v701, 7
      %v703 = vsub.s32 1, %v702
      %v704 = vrot.slane %v695, %v703
      %707 = vrot.lane.b32.xlu0 %v312, 16
      %v708 = vpop.permute.xlu0 %707
      %709 = vrot.lane.b32.xlu0 %v651, 16
      %v710 = vpop.permute.xlu0 %709
      %711 = vrot.lane.b32.xlu0 %v313, 16
      %v712 = vpop.permute.xlu0 %711
      %713 = vrot.lane.b32.xlu0 %v652, 16
      %v714 = vpop.permute.xlu0 %713
      %715 = vrot.lane.b32.xlu0 %v314, 16
      %v716 = vpop.permute.xlu0 %715
      %717 = vrot.lane.b32.xlu0 %v653, 16
      %v718 = vpop.permute.xlu0 %717
      %v719 = vsel %vm347, %v716, %v718
      %v720 = vsel %vm347, %v714, %v716
      %v721 = vsel %vm347, %v712, %v714
      %v722 = vsel %vm347, %v710, %v712
      %v723 = vsel %vm347, %v708, %v710
      %v724 = vsel %vm347, %v718, %v708
      %v725 = vlaneseq
      %v726 = vshrl.u32 %v725, 7
      %v727 = vsub.s32 0, %v726
      %v728 = vrot.slane %v700, %v727
      %v729 = vlaneseq
      %v730 = vshrl.u32 %v729, 7
      %v731 = vsub.s32 0, %v730
      %v732 = vrot.slane %v704, %v731
      %v733 = vmul.f32 %v724, %v728
      %v734 = vmul.f32 %v723, %v732
      %v735 = vmul.f32 %v722, %v728
      %v736 = vmul.f32 %v721, %v732
      %v737 = vmul.f32 %v720, %v728
      %v738 = vmul.f32 %v719, %v732
      %v745 = vrot.slane %v733, 4
      %v746 = vrot.slane %v734, 4
      %v747 = vrot.slane %v735, 4
      %v748 = vrot.slane %v736, 4
      %v749 = vrot.slane %v737, 4
      %v750 = vrot.slane %v738, 4
      %757 = vst [vmem:[#allocation2] sm:$0xf0] %v745
      %758 = vst [vmem:[#allocation2 + $0x8] sm:$0xf0] %v746
      %759 = vst [vmem:[#allocation2 + $0x10] sm:$0xf0] %v747
      %760 = vst [vmem:[#allocation2 + $0x18] sm:$0xf0] %v748
      %761 = vst [vmem:[#allocation2 + $0x20] sm:$0xf0] %v749
      %762 = vst [vmem:[#allocation2 + $0x28] sm:$0xf0] %v750
      %v763 = vld [vmem:[%s380] ss:$8 sm:$0x3]
      %v765 = vlaneseq
      %v766 = vshrl.u32 %v765, 7
      %v767 = vsub.s32 0, %v766
      %v768 = vrot.slane %v763, %v767
      %v769 = vlaneseq
      %v770 = vshrl.u32 %v769, 7
      %v771 = vsub.s32 1, %v770
      %v772 = vrot.slane %v763, %v771
      %775 = vrot.lane.b32.xlu0 %v312, 15
      %v776 = vpop.permute.xlu0 %775
      %777 = vrot.lane.b32.xlu0 %v651, 15
      %v778 = vpop.permute.xlu0 %777
      %779 = vrot.lane.b32.xlu0 %v313, 15
      %v780 = vpop.permute.xlu0 %779
      %781 = vrot.lane.b32.xlu0 %v652, 15
      %v782 = vpop.permute.xlu0 %781
      %783 = vrot.lane.b32.xlu0 %v314, 15
      %v784 = vpop.permute.xlu0 %783
      %785 = vrot.lane.b32.xlu0 %v653, 15
      %v786 = vpop.permute.xlu0 %785
      %v787 = vsel %vm377, %v784, %v786
      %v788 = vsel %vm377, %v782, %v784
      %v789 = vsel %vm377, %v780, %v782
      %v790 = vsel %vm377, %v778, %v780
      %v791 = vsel %vm377, %v776, %v778
      %v792 = vsel %vm377, %v786, %v776
      %v793 = vlaneseq
      %v794 = vshrl.u32 %v793, 7
      %v795 = vsub.s32 0, %v794
      %v796 = vrot.slane %v768, %v795
      %v797 = vlaneseq
      %v798 = vshrl.u32 %v797, 7
      %v799 = vsub.s32 0, %v798
      %v800 = vrot.slane %v772, %v799
      %v801 = vmul.f32 %v792, %v796
      %v802 = vmul.f32 %v791, %v800
      %v803 = vmul.f32 %v790, %v796
      %v804 = vmul.f32 %v789, %v800
      %v805 = vmul.f32 %v788, %v796
      %v806 = vmul.f32 %v787, %v800
      %807 = vst [vmem:[#allocation2 + $0x30] sm:$0xf] %v801
      %808 = vst [vmem:[#allocation2 + $0x38] sm:$0xf] %v802
      %809 = vst [vmem:[#allocation2 + $0x40] sm:$0xf] %v803
      %810 = vst [vmem:[#allocation2 + $0x48] sm:$0xf] %v804
      %811 = vst [vmem:[#allocation2 + $0x50] sm:$0xf] %v805
      %812 = vst [vmem:[#allocation2 + $0x58] sm:$0xf] %v806
      %v813 = vld [vmem:[%s404] ss:$8 sm:$0x3]
      %v815 = vlaneseq
      %v816 = vshrl.u32 %v815, 7
      %v817 = vsub.s32 0, %v816
      %v818 = vrot.slane %v813, %v817
      %v819 = vlaneseq
      %v820 = vshrl.u32 %v819, 7
      %v821 = vsub.s32 1, %v820
      %v822 = vrot.slane %v813, %v821
      %825 = vrot.lane.b32.xlu0 %v312, 1
      %v826 = vpop.permute.xlu0 %825
      %827 = vrot.lane.b32.xlu0 %v651, 1
      %v828 = vpop.permute.xlu0 %827
      %829 = vrot.lane.b32.xlu0 %v313, 1
      %v830 = vpop.permute.xlu0 %829
      %831 = vrot.lane.b32.xlu0 %v652, 1
      %v832 = vpop.permute.xlu0 %831
      %833 = vrot.lane.b32.xlu0 %v314, 1
      %v834 = vpop.permute.xlu0 %833
      %835 = vrot.lane.b32.xlu0 %v653, 1
      %v836 = vpop.permute.xlu0 %835
      %v837 = vsel %vm401, %v834, %v836
      %v838 = vsel %vm401, %v832, %v834
      %v839 = vsel %vm401, %v830, %v832
      %v840 = vsel %vm401, %v828, %v830
      %v841 = vsel %vm401, %v826, %v828
      %v842 = vsel %vm401, %v836, %v826
      %v843 = vlaneseq
      %v844 = vshrl.u32 %v843, 7
      %v845 = vsub.s32 0, %v844
      %v846 = vrot.slane %v818, %v845
      %v847 = vlaneseq
      %v848 = vshrl.u32 %v847, 7
      %v849 = vsub.s32 0, %v848
      %v850 = vrot.slane %v822, %v849
      %v851 = vmul.f32 %v842, %v846
      %v852 = vmul.f32 %v841, %v850
      %v853 = vmul.f32 %v840, %v846
      %v854 = vmul.f32 %v839, %v850
      %v855 = vmul.f32 %v838, %v846
      %v856 = vmul.f32 %v837, %v850
      %v863 = vrot.slane %v851, 4
      %v864 = vrot.slane %v852, 4
      %v865 = vrot.slane %v853, 4
      %v866 = vrot.slane %v854, 4
      %v867 = vrot.slane %v855, 4
      %v868 = vrot.slane %v856, 4
      %875 = vst [vmem:[#allocation2 + $0x30] sm:$0xf0] %v863
      %876 = vst [vmem:[#allocation2 + $0x38] sm:$0xf0] %v864
      %877 = vst [vmem:[#allocation2 + $0x40] sm:$0xf0] %v865
      %878 = vst [vmem:[#allocation2 + $0x48] sm:$0xf0] %v866
      %879 = vst [vmem:[#allocation2 + $0x50] sm:$0xf0] %v867
      %880 = vst [vmem:[#allocation2 + $0x58] sm:$0xf0] %v868
      %881 = vst [vmem:[#allocation2 + $0x60] sm:$0xf] %v312
      %882 = vst [vmem:[#allocation2 + $0x68] sm:$0xf] %v651
      %883 = vst [vmem:[#allocation2 + $0x70] sm:$0xf] %v313
      %884 = vst [vmem:[#allocation2 + $0x78] sm:$0xf] %v652
      %885 = vst [vmem:[#allocation2 + $0x80] sm:$0xf] %v314
      %886 = vst [vmem:[#allocation2 + $0x88] sm:$0xf] %v653
      %v887 = vld [vmem:[%s436] ss:$8 sm:$0x3]
      %v889 = vlaneseq
      %v890 = vshrl.u32 %v889, 7
      %v891 = vsub.s32 0, %v890
      %v892 = vrot.slane %v887, %v891
      %v893 = vlaneseq
      %v894 = vshrl.u32 %v893, 7
      %v895 = vsub.s32 1, %v894
      %v896 = vrot.slane %v887, %v895
      %899 = vrot.lane.b32.xlu0 %v312, 127
      %v900 = vpop.permute.xlu0 %899
      %901 = vrot.lane.b32.xlu0 %v651, 127
      %v902 = vpop.permute.xlu0 %901
      %903 = vrot.lane.b32.xlu0 %v313, 127
      %v904 = vpop.permute.xlu0 %903
      %905 = vrot.lane.b32.xlu0 %v652, 127
      %v906 = vpop.permute.xlu0 %905
      %907 = vrot.lane.b32.xlu0 %v314, 127
      %v908 = vpop.permute.xlu0 %907
      %909 = vrot.lane.b32.xlu0 %v653, 127
      %v910 = vpop.permute.xlu0 %909
      %v911 = vsel %vm433, %v908, %v910
      %v912 = vsel %vm433, %v906, %v908
      %v913 = vsel %vm433, %v904, %v906
      %v914 = vsel %vm433, %v902, %v904
      %v915 = vsel %vm433, %v900, %v902
      %v916 = vsel %vm433, %v910, %v900
      %v917 = vlaneseq
      %v918 = vshrl.u32 %v917, 7
      %v919 = vsub.s32 0, %v918
      %v920 = vrot.slane %v892, %v919
      %v921 = vlaneseq
      %v922 = vshrl.u32 %v921, 7
      %v923 = vsub.s32 0, %v922
      %v924 = vrot.slane %v896, %v923
      %v925 = vmul.f32 %v915, %v920
      %v926 = vmul.f32 %v914, %v924
      %v927 = vmul.f32 %v913, %v920
      %v928 = vmul.f32 %v912, %v924
      %v929 = vmul.f32 %v911, %v920
      %v930 = vmul.f32 %v916, %v924
      %v937 = vrot.slane %v925, 4
      %v938 = vrot.slane %v926, 4
      %v939 = vrot.slane %v927, 4
      %v940 = vrot.slane %v928, 4
      %v941 = vrot.slane %v929, 4
      %v942 = vrot.slane %v930, 4
      %949 = vst [vmem:[#allocation2 + $0x60] sm:$0xf0] %v937
      %950 = vst [vmem:[#allocation2 + $0x68] sm:$0xf0] %v938
      %951 = vst [vmem:[#allocation2 + $0x70] sm:$0xf0] %v939
      %952 = vst [vmem:[#allocation2 + $0x78] sm:$0xf0] %v940
      %953 = vst [vmem:[#allocation2 + $0x80] sm:$0xf0] %v941
      %954 = vst [vmem:[#allocation2 + $0x88] sm:$0xf0] %v942
      %v955 = vld [vmem:[%s466] ss:$8 sm:$0x3]
      %v957 = vlaneseq
      %v958 = vshrl.u32 %v957, 7
      %v959 = vsub.s32 0, %v958
      %v960 = vrot.slane %v955, %v959
      %v961 = vlaneseq
      %v962 = vshrl.u32 %v961, 7
      %v963 = vsub.s32 1, %v962
      %v964 = vrot.slane %v955, %v963
      %967 = vrot.lane.b32.xlu0 %v312, 113
      %v968 = vpop.permute.xlu0 %967
      %969 = vrot.lane.b32.xlu0 %v651, 113
      %v970 = vpop.permute.xlu0 %969
      %971 = vrot.lane.b32.xlu0 %v313, 113
      %v972 = vpop.permute.xlu0 %971
      %973 = vrot.lane.b32.xlu0 %v652, 113
      %v974 = vpop.permute.xlu0 %973
      %975 = vrot.lane.b32.xlu0 %v314, 113
      %v976 = vpop.permute.xlu0 %975
      %977 = vrot.lane.b32.xlu0 %v653, 113
      %v978 = vpop.permute.xlu0 %977
      %v979 = vsel %vm463, %v976, %v978
      %v980 = vsel %vm463, %v974, %v976
      %v981 = vsel %vm463, %v972, %v974
      %v982 = vsel %vm463, %v970, %v972
      %v983 = vsel %vm463, %v968, %v970
      %v984 = vsel %vm463, %v978, %v968
      %v985 = vlaneseq
      %v986 = vshrl.u32 %v985, 7
      %v987 = vsub.s32 0, %v986
      %v988 = vrot.slane %v960, %v987
      %v989 = vlaneseq
      %v990 = vshrl.u32 %v989, 7
      %v991 = vsub.s32 0, %v990
      %v992 = vrot.slane %v964, %v991
      %v993 = vmul.f32 %v983, %v988
      %v994 = vmul.f32 %v982, %v992
      %v995 = vmul.f32 %v981, %v988
      %v996 = vmul.f32 %v980, %v992
      %v997 = vmul.f32 %v979, %v988
      %v998 = vmul.f32 %v984, %v992
      %999 = vst [vmem:[#allocation2 + $0x90] sm:$0xf] %v993
      %1000 = vst [vmem:[#allocation2 + $0x98] sm:$0xf] %v994
      %1001 = vst [vmem:[#allocation2 + $0xa0] sm:$0xf] %v995
      %1002 = vst [vmem:[#allocation2 + $0xa8] sm:$0xf] %v996
      %1003 = vst [vmem:[#allocation2 + $0xb0] sm:$0xf] %v997
      %1004 = vst [vmem:[#allocation2 + $0xb8] sm:$0xf] %v998
      %v1005 = vld [vmem:[%s490] ss:$8 sm:$0x3]
      %v1007 = vlaneseq
      %v1008 = vshrl.u32 %v1007, 7
      %v1009 = vsub.s32 0, %v1008
      %v1010 = vrot.slane %v1005, %v1009
      %v1011 = vlaneseq
      %v1012 = vshrl.u32 %v1011, 7
      %v1013 = vsub.s32 1, %v1012
      %v1014 = vrot.slane %v1005, %v1013
      %1017 = vrot.lane.b32.xlu0 %v312, 112
      %v1018 = vpop.permute.xlu0 %1017
      %1019 = vrot.lane.b32.xlu0 %v651, 112
      %v1020 = vpop.permute.xlu0 %1019
      %1021 = vrot.lane.b32.xlu0 %v313, 112
      %v1022 = vpop.permute.xlu0 %1021
      %1023 = vrot.lane.b32.xlu0 %v652, 112
      %v1024 = vpop.permute.xlu0 %1023
      %1025 = vrot.lane.b32.xlu0 %v314, 112
      %v1026 = vpop.permute.xlu0 %1025
      %1027 = vrot.lane.b32.xlu0 %v653, 112
      %v1028 = vpop.permute.xlu0 %1027
      %v1029 = vsel %vm487, %v1026, %v1028
      %v1030 = vsel %vm487, %v1024, %v1026
      %v1031 = vsel %vm487, %v1022, %v1024
      %v1032 = vsel %vm487, %v1020, %v1022
      %v1033 = vsel %vm487, %v1018, %v1020
      %v1034 = vsel %vm487, %v1028, %v1018
      %v1035 = vlaneseq
      %v1036 = vshrl.u32 %v1035, 7
      %v1037 = vsub.s32 0, %v1036
      %v1038 = vrot.slane %v1010, %v1037
      %v1039 = vlaneseq
      %v1040 = vshrl.u32 %v1039, 7
      %v1041 = vsub.s32 0, %v1040
      %v1042 = vrot.slane %v1014, %v1041
      %v1043 = vmul.f32 %v1033, %v1038
      %v1044 = vmul.f32 %v1032, %v1042
      %v1045 = vmul.f32 %v1031, %v1038
      %v1046 = vmul.f32 %v1030, %v1042
      %v1047 = vmul.f32 %v1029, %v1038
      %v1048 = vmul.f32 %v1034, %v1042
      %v1055 = vrot.slane %v1043, 4
      %v1056 = vrot.slane %v1044, 4
      %v1057 = vrot.slane %v1045, 4
      %v1058 = vrot.slane %v1046, 4
      %v1059 = vrot.slane %v1047, 4
      %v1060 = vrot.slane %v1048, 4
      %1067 = vst [vmem:[#allocation2 + $0x90] sm:$0xf0] %v1055
      %1068 = vst [vmem:[#allocation2 + $0x98] sm:$0xf0] %v1056
      %1069 = vst [vmem:[#allocation2 + $0xa0] sm:$0xf0] %v1057
      %1070 = vst [vmem:[#allocation2 + $0xa8] sm:$0xf0] %v1058
      %1071 = vst [vmem:[#allocation2 + $0xb0] sm:$0xf0] %v1059
      %1072 = vst [vmem:[#allocation2 + $0xb8] sm:$0xf0] %v1060
      %v1073 = vld [vmem:[%s520] ss:$8 sm:$0x3]
      %v1075 = vlaneseq
      %v1076 = vshrl.u32 %v1075, 7
      %v1077 = vsub.s32 0, %v1076
      %v1078 = vrot.slane %v1073, %v1077
      %v1079 = vlaneseq
      %v1080 = vshrl.u32 %v1079, 7
      %v1081 = vsub.s32 1, %v1080
      %v1082 = vrot.slane %v1073, %v1081
      %1085 = vrot.lane.b32.xlu0 %v312, 111
      %v1086 = vpop.permute.xlu0 %1085
      %1087 = vrot.lane.b32.xlu0 %v651, 111
      %v1088 = vpop.permute.xlu0 %1087
      %1089 = vrot.lane.b32.xlu0 %v313, 111
      %v1090 = vpop.permute.xlu0 %1089
      %1091 = vrot.lane.b32.xlu0 %v652, 111
      %v1092 = vpop.permute.xlu0 %1091
      %1093 = vrot.lane.b32.xlu0 %v314, 111
      %v1094 = vpop.permute.xlu0 %1093
      %1095 = vrot.lane.b32.xlu0 %v653, 111
      %v1096 = vpop.permute.xlu0 %1095
      %v1097 = vsel %vm517, %v1094, %v1096
      %v1098 = vsel %vm517, %v1092, %v1094
      %v1099 = vsel %vm517, %v1090, %v1092
      %v1100 = vsel %vm517, %v1088, %v1090
      %v1101 = vsel %vm517, %v1086, %v1088
      %v1102 = vsel %vm517, %v1096, %v1086
      %v1103 = vlaneseq
      %v1104 = vshrl.u32 %v1103, 7
      %v1105 = vsub.s32 0, %v1104
      %v1106 = vrot.slane %v1078, %v1105
      %v1107 = vlaneseq
      %v1108 = vshrl.u32 %v1107, 7
      %v1109 = vsub.s32 0, %v1108
      %v1110 = vrot.slane %v1082, %v1109
      %v1111 = vmul.f32 %v1101, %v1106
      %v1112 = vmul.f32 %v1100, %v1110
      %v1113 = vmul.f32 %v1099, %v1106
      %v1114 = vmul.f32 %v1098, %v1110
      %v1115 = vmul.f32 %v1097, %v1106
      %v1116 = vmul.f32 %v1102, %v1110
      %1117 = vst [vmem:[#allocation2 + $0xc0] sm:$0xf] %v1111
      %1118 = vst [vmem:[#allocation2 + $0xc8] sm:$0xf] %v1112
      %1119 = vst [vmem:[#allocation2 + $0xd0] sm:$0xf] %v1113
      %1120 = vst [vmem:[#allocation2 + $0xd8] sm:$0xf] %v1114
      %1121 = vst [vmem:[#allocation2 + $0xe0] sm:$0xf] %v1115
      %1122 = vst [vmem:[#allocation2 + $0xe8] sm:$0xf] %v1116
      %v1123 = vld [vmem:[%s2] sm:$0xff]
      %v1124 = vld [vmem:[#allocation2] sm:$0xff]
      %v1125 = vld [vmem:[#allocation2 + $0x8] sm:$0xff]
      %v1126 = vld [vmem:[#allocation2 + $0x10] sm:$0xff]
      %v1127 = vld [vmem:[#allocation2 + $0x18] sm:$0xff]
      %v1128 = vld [vmem:[#allocation2 + $0x20] sm:$0xff]
      %v1129 = vld [vmem:[#allocation2 + $0x28] sm:$0xff]
      %v1130 = vld [vmem:[#allocation2 + $0x30] sm:$0xff]
      %v1131 = vld [vmem:[#allocation2 + $0x38] sm:$0xff]
      %v1132 = vld [vmem:[#allocation2 + $0x40] sm:$0xff]
      %v1133 = vld [vmem:[#allocation2 + $0x48] sm:$0xff]
      %v1134 = vld [vmem:[#allocation2 + $0x50] sm:$0xff]
      %v1135 = vld [vmem:[#allocation2 + $0x58] sm:$0xff]
      %v1136 = vld [vmem:[#allocation2 + $0x60] sm:$0xff]
      %v1137 = vld [vmem:[#allocation2 + $0x68] sm:$0xff]
      %v1138 = vld [vmem:[#allocation2 + $0x70] sm:$0xff]
      %v1139 = vld [vmem:[#allocation2 + $0x78] sm:$0xff]
      %v1140 = vld [vmem:[#allocation2 + $0x80] sm:$0xff]
      %v1141 = vld [vmem:[#allocation2 + $0x88] sm:$0xff]
      %v1142 = vld [vmem:[#allocation2 + $0x90] sm:$0xff]
      %v1143 = vld [vmem:[#allocation2 + $0x98] sm:$0xff]
      %v1144 = vld [vmem:[#allocation2 + $0xa0] sm:$0xff]
      %v1145 = vld [vmem:[#allocation2 + $0xa8] sm:$0xff]
      %v1146 = vld [vmem:[#allocation2 + $0xb0] sm:$0xff]
      %v1147 = vld [vmem:[#allocation2 + $0xb8] sm:$0xff]
      %v1148 = vld [vmem:[#allocation2 + $0xc0] sm:$0xf]
      %v1149 = vld [vmem:[#allocation2 + $0xc8] sm:$0xf]
      %v1150 = vld [vmem:[#allocation2 + $0xd0] sm:$0xf]
      %v1151 = vld [vmem:[#allocation2 + $0xd8] sm:$0xf]
      %v1152 = vld [vmem:[#allocation2 + $0xe0] sm:$0xf]
      %v1153 = vld [vmem:[#allocation2 + $0xe8] sm:$0xf]
      %v1155 = vsel %vm554, %v1123, 0
      %v1158 = vsel %vm558, %v1148, 0
      %v1161 = vsel %vm558, %v1149, 0
      %v1164 = vsel %vm558, %v1150, 0
      %v1167 = vsel %vm558, %v1151, 0
      %v1170 = vsel %vm558, %v1152, 0
      %v1173 = vsel %vm558, %v1153, 0
      %1175 = vmatprep.subr.mxu0 %v1125
      %1176 = vmatpush1.msra.mxu0 %v1124
      %1177 = vmatprep.subr.mxu0 %v1131
      %1178 = vmatpush1.msra.mxu0 %v1130
      %1179 = vmatprep.subr.mxu0 %v1137
      %1180 = vmatpush1.msra.mxu0 %v1136
      %1181 = vmatprep.subr.mxu0 %v1143
      %1182 = vmatpush1.msra.mxu0 %v1142
      %1183 = vmatprep.subr.mxu0 %v1161
      %1184 = vmatpush1.msra.mxu0 %v1158
      %1185 = vmatprep.subr.mxu0 0.0
      %1186 = vmatpush1.msra.mxu0 0.0
      %1187 = vmatprep.subr.mxu0 0.0
      %1188 = vmatpush1.msra.mxu0 0.0
      %1189 = vmatprep.subr.mxu0 0.0
      %1190 = vmatpush1.msra.mxu0 0.0
      %1191 = vmatprep.subr.mxu0 0.0
      %1192 = vmatpush1.msra.mxu0 0.0
      %1193 = vmatprep.subr.mxu0 0.0
      %1194 = vmatpush1.msra.mxu0 0.0
      %1195 = vmatprep.subr.mxu0 0.0
      %1196 = vmatpush1.msra.mxu0 0.0
      %1197 = vmatprep.subr.mxu0 0.0
      %1198 = vmatpush1.msra.mxu0 0.0
      %1199 = vmatprep.subr.mxu0 0.0
      %1200 = vmatpush1.msra.mxu0 0.0
      %1201 = vmatprep.subr.mxu0 0.0
      %1202 = vmatpush1.msra.mxu0 0.0
      %1203 = vmatprep.subr.mxu0 0.0
      %1204 = vmatpush1.msra.mxu0 0.0
      %1205 = vmatprep.subr.mxu0 0.0
      %1206 = vmatpush1.msra.mxu0 0.0
      %1207 = vmatprep.subr.mxu0 0.0
      %1208 = vmatpush1.msra.mxu0 0.0
      %1209 = vmatprep.subr.mxu0 0.0
      %1210 = vmatpush1.msra.mxu0 0.0
      %1211 = vmatprep.subr.mxu0 0.0
      %1212 = vmatpush1.msra.mxu0 0.0
      %1213 = vmatprep.subr.mxu0 0.0
      %1214 = vmatpush1.msra.mxu0 0.0
      %1215 = vmatprep.subr.mxu0 0.0
      %1216 = vmatpush1.msra.mxu0 0.0
      %1217 = vmatprep.subr.mxu0 0.0
      %1218 = vmatpush1.msra.mxu0 0.0
      %1219 = vmatprep.subr.mxu0 0.0
      %1220 = vmatpush1.msra.mxu0 0.0
      %1221 = vmatprep.subr.mxu0 0.0
      %1222 = vmatpush1.msra.mxu0 0.0
      %1223 = vmatprep.subr.mxu0 0.0
      %1224 = vmatpush1.msra.mxu0 0.0
      %1225 = vmatprep.subr.mxu0 0.0
      %1226 = vmatpush1.msra.mxu0 0.0
      %1227 = vmatprep.subr.mxu0 0.0
      %1228 = vmatpush1.msra.mxu0 0.0
      %1229 = vmatprep.subr.mxu0 0.0
      %1230 = vmatpush1.msra.mxu0 0.0
      %1231 = vmatprep.subr.mxu0 0.0
      %1232 = vmatpush1.msra.mxu0 0.0
      %1233 = vmatprep.subr.mxu0 0.0
      %1234 = vmatpush1.msra.mxu0 0.0
      %1235 = vmatprep.subr.mxu0 0.0
      %1236 = vmatpush1.msra.mxu0 0.0
      %1237 = vmatprep.subr.mxu0 0.0
      %1238 = vmatpush1.msra.mxu0 0.0
      %1239 = vmatprep.mubr.f32.mxu0 0.0
      %1240 = vmatmul.mubr.f32.gmra.mrb[0].mxu0 %v1155
      %v1241 = vpop.f32.mrb[0].mxu0
      %v1242 = vadd.f32 %v632, %v1241
      %v1243 = vpop.f32.mrb[0].mxu0
      %v1244 = vadd.f32 %v634, %v1243
      %1245 = vdwg.mxu0
      %1246 = vmatprep.subr.mxu0 %v1127
      %1247 = vmatpush1.msra.mxu0 %v1126
      %1248 = vmatprep.subr.mxu0 %v1133
      %1249 = vmatpush1.msra.mxu0 %v1132
      %1250 = vmatprep.subr.mxu0 %v1139
      %1251 = vmatpush1.msra.mxu0 %v1138
      %1252 = vmatprep.subr.mxu0 %v1145
      %1253 = vmatpush1.msra.mxu0 %v1144
      %1254 = vmatprep.subr.mxu0 %v1167
      %1255 = vmatpush1.msra.mxu0 %v1164
      %1256 = vmatprep.subr.mxu0 0.0
      %1257 = vmatpush1.msra.mxu0 0.0
      %1258 = vmatprep.subr.mxu0 0.0
      %1259 = vmatpush1.msra.mxu0 0.0
      %1260 = vmatprep.subr.mxu0 0.0
      %1261 = vmatpush1.msra.mxu0 0.0
      %1262 = vmatprep.subr.mxu0 0.0
      %1263 = vmatpush1.msra.mxu0 0.0
      %1264 = vmatprep.subr.mxu0 0.0
      %1265 = vmatpush1.msra.mxu0 0.0
      %1266 = vmatprep.subr.mxu0 0.0
      %1267 = vmatpush1.msra.mxu0 0.0
      %1268 = vmatprep.subr.mxu0 0.0
      %1269 = vmatpush1.msra.mxu0 0.0
      %1270 = vmatprep.subr.mxu0 0.0
      %1271 = vmatpush1.msra.mxu0 0.0
      %1272 = vmatprep.subr.mxu0 0.0
      %1273 = vmatpush1.msra.mxu0 0.0
      %1274 = vmatprep.subr.mxu0 0.0
      %1275 = vmatpush1.msra.mxu0 0.0
      %1276 = vmatprep.subr.mxu0 0.0
      %1277 = vmatpush1.msra.mxu0 0.0
      %1278 = vmatprep.subr.mxu0 0.0
      %1279 = vmatpush1.msra.mxu0 0.0
      %1280 = vmatprep.subr.mxu0 0.0
      %1281 = vmatpush1.msra.mxu0 0.0
      %1282 = vmatprep.subr.mxu0 0.0
      %1283 = vmatpush1.msra.mxu0 0.0
      %1284 = vmatprep.subr.mxu0 0.0
      %1285 = vmatpush1.msra.mxu0 0.0
      %1286 = vmatprep.subr.mxu0 0.0
      %1287 = vmatpush1.msra.mxu0 0.0
      %1288 = vmatprep.subr.mxu0 0.0
      %1289 = vmatpush1.msra.mxu0 0.0
      %1290 = vmatprep.subr.mxu0 0.0
      %1291 = vmatpush1.msra.mxu0 0.0
      %1292 = vmatprep.subr.mxu0 0.0
      %1293 = vmatpush1.msra.mxu0 0.0
      %1294 = vmatprep.subr.mxu0 0.0
      %1295 = vmatpush1.msra.mxu0 0.0
      %1296 = vmatprep.subr.mxu0 0.0
      %1297 = vmatpush1.msra.mxu0 0.0
      %1298 = vmatprep.subr.mxu0 0.0
      %1299 = vmatpush1.msra.mxu0 0.0
      %1300 = vmatprep.subr.mxu0 0.0
      %1301 = vmatpush1.msra.mxu0 0.0
      %1302 = vmatprep.subr.mxu0 0.0
      %1303 = vmatpush1.msra.mxu0 0.0
      %1304 = vmatprep.subr.mxu0 0.0
      %1305 = vmatpush1.msra.mxu0 0.0
      %1306 = vmatprep.subr.mxu0 0.0
      %1307 = vmatpush1.msra.mxu0 0.0
      %1308 = vmatprep.subr.mxu0 0.0
      %1309 = vmatpush1.msra.mxu0 0.0
      %1310 = vmatprep.mubr.f32.mxu0 0.0
      %1311 = vmatmul.mubr.f32.gmra.mrb[0].mxu0 %v1155
      %v1312 = vpop.f32.mrb[0].mxu0
      %v1313 = vadd.f32 %v632, %v1312
      %v1314 = vpop.f32.mrb[0].mxu0
      %v1315 = vadd.f32 %v634, %v1314
      %1316 = vdwg.mxu0
      %1317 = vmatprep.subr.mxu0 %v1129
      %1318 = vmatpush1.msra.mxu0 %v1128
      %1319 = vmatprep.subr.mxu0 %v1135
      %1320 = vmatpush1.msra.mxu0 %v1134
      %1321 = vmatprep.subr.mxu0 %v1141
      %1322 = vmatpush1.msra.mxu0 %v1140
      %1323 = vmatprep.subr.mxu0 %v1147
      %1324 = vmatpush1.msra.mxu0 %v1146
      %1325 = vmatprep.subr.mxu0 %v1173
      %1326 = vmatpush1.msra.mxu0 %v1170
      %1327 = vmatprep.subr.mxu0 0.0
      %1328 = vmatpush1.msra.mxu0 0.0
      %1329 = vmatprep.subr.mxu0 0.0
      %1330 = vmatpush1.msra.mxu0 0.0
      %1331 = vmatprep.subr.mxu0 0.0
      %1332 = vmatpush1.msra.mxu0 0.0
      %1333 = vmatprep.subr.mxu0 0.0
      %1334 = vmatpush1.msra.mxu0 0.0
      %1335 = vmatprep.subr.mxu0 0.0
      %1336 = vmatpush1.msra.mxu0 0.0
      %1337 = vmatprep.subr.mxu0 0.0
      %1338 = vmatpush1.msra.mxu0 0.0
      %1339 = vmatprep.subr.mxu0 0.0
      %1340 = vmatpush1.msra.mxu0 0.0
      %1341 = vmatprep.subr.mxu0 0.0
      %1342 = vmatpush1.msra.mxu0 0.0
      %1343 = vmatprep.subr.mxu0 0.0
      %1344 = vmatpush1.msra.mxu0 0.0
      %1345 = vmatprep.subr.mxu0 0.0
      %1346 = vmatpush1.msra.mxu0 0.0
      %1347 = vmatprep.subr.mxu0 0.0
      %1348 = vmatpush1.msra.mxu0 0.0
      %1349 = vmatprep.subr.mxu0 0.0
      %1350 = vmatpush1.msra.mxu0 0.0
      %1351 = vmatprep.subr.mxu0 0.0
      %1352 = vmatpush1.msra.mxu0 0.0
      %1353 = vmatprep.subr.mxu0 0.0
      %1354 = vmatpush1.msra.mxu0 0.0
      %1355 = vmatprep.subr.mxu0 0.0
      %1356 = vmatpush1.msra.mxu0 0.0
      %1357 = vmatprep.subr.mxu0 0.0
      %1358 = vmatpush1.msra.mxu0 0.0
      %1359 = vmatprep.subr.mxu0 0.0
      %1360 = vmatpush1.msra.mxu0 0.0
      %1361 = vmatprep.subr.mxu0 0.0
      %1362 = vmatpush1.msra.mxu0 0.0
      %1363 = vmatprep.subr.mxu0 0.0
      %1364 = vmatpush1.msra.mxu0 0.0
      %1365 = vmatprep.subr.mxu0 0.0
      %1366 = vmatpush1.msra.mxu0 0.0
      %1367 = vmatprep.subr.mxu0 0.0
      %1368 = vmatpush1.msra.mxu0 0.0
      %1369 = vmatprep.subr.mxu0 0.0
      %1370 = vmatpush1.msra.mxu0 0.0
      %1371 = vmatprep.subr.mxu0 0.0
      %1372 = vmatpush1.msra.mxu0 0.0
      %1373 = vmatprep.subr.mxu0 0.0
      %1374 = vmatpush1.msra.mxu0 0.0
      %1375 = vmatprep.subr.mxu0 0.0
      %1376 = vmatpush1.msra.mxu0 0.0
      %1377 = vmatprep.subr.mxu0 0.0
      %1378 = vmatpush1.msra.mxu0 0.0
      %1379 = vmatprep.subr.mxu0 0.0
      %1380 = vmatpush1.msra.mxu0 0.0
      %1381 = vmatprep.mubr.f32.mxu0 0.0
      %1382 = vmatmul.mubr.f32.gmra.mrb[0].mxu0 %v1155
      %v1383 = vpop.f32.mrb[0].mxu0
      %v1384 = vadd.f32 %v632, %v1383
      %v1385 = vpop.f32.mrb[0].mxu0
      %v1386 = vadd.f32 %v634, %v1385
      %1387 = vdwg.mxu0
      %v1388 = vtanh.pop %v1242
      %v1389 = vtanh.pop %v1244
      %v1390 = vtanh.pop %v1313
      %v1391 = vtanh.pop %v1315
      %v1392 = vtanh.pop %v1384
      %v1393 = vtanh.pop %v1386
      %v1394 = vand.u32 2147483647, %v1388
      %v1395 = vand.u32 2147483647, %v1389
      %v1396 = vand.u32 2147483647, %v1390
      %v1397 = vand.u32 2147483647, %v1391
      %v1398 = vand.u32 2147483647, %v1392
      %v1399 = vand.u32 2147483647, %v1393
      %v1406 = vrot.slane %v1242, 4
      %v1407 = vrot.slane %v1244, 4
      %v1408 = vrot.slane %v1313, 4
      %v1409 = vrot.slane %v1315, 4
      %v1410 = vrot.slane %v1384, 4
      %v1411 = vrot.slane %v1386, 4
      %v1418 = vmul.f32 %v1394, %v1406
      %v1419 = vmul.f32 %v1395, %v1407
      %v1420 = vmul.f32 %v1396, %v1408
      %v1421 = vmul.f32 %v1397, %v1409
      %v1422 = vmul.f32 %v1398, %v1410
      %v1423 = vmul.f32 %v1399, %v1411
      %v1430 = vcombine.low %v1418, %v1419
      %v1431 = vcombine.low %v1420, %v1421
      %v1432 = vcombine.low %v1422, %v1423
      %1436 = vst [vmem:[%s309] sm:$0xff] %v1430
      %1437 = vst [vmem:[%s309 + $0x8] sm:$0xff] %v1431
      %1438 = vst [vmem:[%s309 + $0x10] sm:$0xff] %v1432
      %s1439 = smul.u32 6, %s22
      %p1440 = scmp.lt.s32.totalorder %s21, 1
      %s1441 = scalar_select %p1440, %s21, 1
      %p1442 = scmp.lt.s32.totalorder %s1439, 5
      %s1443 = scalar_select %p1442, %s1439, 5
      %s1444 = smul.addr %s1441, 6
      %s1445 = sadd.s32 %s1443, %s1444
      %s1446 = smul.addr %s1445, 4
      %s1447 = scalar_lea.vmem %s6, %s1446
      // Predicated region
      $region45: #{correlation_unit_forward.1} parent=43 // pred_check
        %p1448 = pneg %p187
      $region46: #{correlation_unit_forward.1} parent=43 // pred_check_branch
        %1450 = sbr.rel (%p1448) target = $region48
      $region47: #{correlation_unit_forward.1} parent=43 // pred_region
        %s1451 = smul.u32 6, %s22
      $region48: #{correlation_unit_forward.1} parent=43 // pred_fallthru
        _
    $region44: #{correlation_unit_forward.1} parent=5 // pred_fallthru
      _
    %p1452 = scmp.le.s32.totalorder 2, %s12
    // Predicated region
    $region49: #{correlation_unit_forward.1} parent=5 // pred_check
      %p1453 = pneg %p1452
    $region50: #{correlation_unit_forward.1} parent=5 // pred_check_branch
      %1455 = sbr.rel (%p1453) target = $region52
    $region51: #{correlation_unit_forward.1} parent=5 // pred_region
      %s1456 = ssub.s32 %s12, 2
      // Predicated region
      $region53: #{correlation_unit_forward.1} parent=51 // pred_check
        %p1457 = pneg %p193
      $region54: #{correlation_unit_forward.1} parent=51 // pred_check_branch
        %1459 = sbr.rel (%p1457) target = $region56
      $region55: #{correlation_unit_forward.1} parent=51 // pred_region
        %s1460 = smul.u32 6, %s24
        %p1461 = scmp.lt.s32.totalorder %s23, 1
        %s1462 = scalar_select %p1461, %s23, 1
        %p1463 = scmp.lt.s32.totalorder %s1460, 5
        %s1464 = scalar_select %p1463, %s1460, 5
        %s1465 = smul.addr %s1462, 6
        %s1466 = sadd.s32 %s1464, %s1465
        %s1467 = smul.addr %s1466, 4
        %s1468 = scalar_lea.vmem %s6, %s1467
      $region56: #{correlation_unit_forward.1} parent=51 // pred_fallthru
        _
    $region52: #{correlation_unit_forward.1} parent=5 // pred_fallthru
      _
  $region6: #{correlation_unit_forward.1} parent=0 // loop_footer
    %s16 = sadd.s32 1, %s12
  $region7: #{correlation_unit_forward.1} parent=0 // loop_footer_branch
    %11 = sbr.rel target = $region3
  $region8: #{correlation_unit_forward.1} parent=0 // loop_exit
    _

</llo_original>
